<compile_context>
chip_gen: v6e
topology: v6e:2x2x1
jax: 0.10.0
libtpu: 0.0.40
codegen_flags: <defaults>
</compile_context>

<pallas_src>
import jax
import jax.numpy as jnp
from jax import lax
from jax.experimental import pallas as pl
from jax.experimental.pallas import tpu as pltpu

# ------------------------------ constants -----------------------------------

N_SAMPLES = 25          # per layer_specs in the reference module
EMB_DIM = 64
AGG_DIM = 128

# Generation-aware tiling: v5e/v6e have 128 MiB VMEM per core, v7x has 64 MiB.
try:
    _VMEM_BYTES = int(pltpu.get_tpu_info().vmem_capacity_bytes)
except Exception:  # conservative fallback (v7x-safe)
    _VMEM_BYTES = 64 * 2**20
if _VMEM_BYTES > 96 * 2**20:          # v5e / v6e
    MAX_TM, VMEM_LIMIT = 1024, 96 * 2**20
else:                                 # v7x
    MAX_TM, VMEM_LIMIT = 256, 44 * 2**20


def _round_up(n, m):
    return ((n + m - 1) // m) * m


def _row_tile(n, max_tm=None):
    """Batch-row tile: multiple of 16 (bf16 sublane packing), aims for >= 2
    grid steps (keeps both v7x TensorCores busy) and <~12.5% padding waste."""
    if max_tm is None:
        max_tm = MAX_TM
    n = max(int(n), 1)
    tm = min(max_tm, _round_up(-(-n // 2), 16))     # ~half the rows -> grid>=2
    floor = 16 if n < 64 else 64
    while tm > floor and (_round_up(n, tm) - n) * 8 > _round_up(n, 16):
        tm -= 16
    return tm, _round_up(n, tm)


def _pad_axis(x, axis, target):
    n = x.shape[axis]
    if n == target:
        return x
    pad = [(0, 0)] * x.ndim
    pad[axis] = (0, target - n)
    return jnp.pad(x, pad)


# ----------------------------- fused Pallas kernel ---------------------------

def gs_fused_kernel(e1_ref, e2m_ref,
                    wx1_ref, wn1_ref, bx1_ref, bn1_ref,
                    wx2h_ref, cx2_ref, wn2l_ref, wn2h_ref,
                    fcwl_ref, fcwh_ref, fcb_ref, o_ref):
    """Per batch-row tile: agg1 for the 25 level-1 neighbours (prep folded into
    the weights), grouped neighbour means as slab adds over the neighbour-major
    leading axis, agg2 (identity), L2-normalize and the final 256->1 fc.

    e1_ref, e2m_ref: (S, TM, 64) bf16 with the neighbour index j OUTERMOST so
    every grouped mean is a sum of whole (TM, C) slabs (cheap VPU adds, no
    cross-sublane relayout)."""
    f32 = jnp.float32
    s, tm, d = e1_ref.shape
    inv_s = 1.0 / s

    x3 = e1_ref[...]                              # (S, TM, 64) bf16
    n3 = e2m_ref[...]                             # (S, TM, 64) bf16
    # Merging the leading dims keeps the minor dim intact and tm % 8 == 0, so
    # this reshape does not cross (8,128) tile boundaries.
    x_all = x3.reshape(s * tm, d)
    n_all = n3.reshape(s * tm, d)

    # ---- agg1 (relu) for all S*TM level-1 nodes, then mean over the S
    # neighbours of each batch row (slabs j*tm : (j+1)*tm). ----
    bx1 = bx1_ref[...]
    zx = jnp.dot(x_all, wx1_ref[...], preferred_element_type=f32)   # (S*TM,128)
    a1x_m = jnp.maximum(zx[0:tm] + bx1, 0.0)
    for j in range(1, s):
        a1x_m = a1x_m + jnp.maximum(zx[j * tm:(j + 1) * tm] + bx1, 0.0)
    a1x_m = a1x_m * inv_s                                            # (TM,128)

    bn1 = bn1_ref[...]
    zn = jnp.dot(n_all, wn1_ref[...], preferred_element_type=f32)    # (S*TM,128)
    a1n_m = jnp.maximum(zn[0:tm] + bn1, 0.0)
    for j in range(1, s):
        a1n_m = a1n_m + jnp.maximum(zn[j * tm:(j + 1) * tm] + bn1, 0.0)
    a1n_m = a1n_m * inv_s                                            # (TM,128)

    # ---- a0 neighbour branch: mean_j e1 -> agg1 fc_neib -> relu.  (The a0
    # x-branch is a batch-independent constant; it enters below via cx2.) ----
    e1s = x_all[0:tm].astype(f32)
    for j in range(1, s):
        e1s = e1s + x_all[j * tm:(j + 1) * tm].astype(f32)
    e1m = (e1s * inv_s).astype(jnp.bfloat16)                         # (TM,64)
    a0n = jnp.maximum(
        jnp.dot(e1m, wn1_ref[...], preferred_element_type=f32) + bn1, 0.0)

    # ---- agg2 (identity); the two 128-wide halves stay separate (no concat).
    h_lo = cx2_ref[...] + jnp.dot(a0n.astype(jnp.bfloat16), wx2h_ref[...],
                                  preferred_element_type=f32)        # (TM,128)
    h_hi = (jnp.dot(a1x_m.astype(jnp.bfloat16), wn2l_ref[...],
                    preferred_element_type=f32)
            + jnp.dot(a1n_m.astype(jnp.bfloat16), wn2h_ref[...],
                      preferred_element_type=f32))                   # (TM,128)

    # ---- F.normalize(dim=1) + fc(256 -> 1): VPU multiply + row reduce,
    # rsqrt on the EUP.  (torch eps semantics: 1/max(||h||, 1e-12).) ----
    sumsq = (jnp.sum(h_lo * h_lo, axis=1, keepdims=True)
             + jnp.sum(h_hi * h_hi, axis=1, keepdims=True))
    inv_norm = lax.rsqrt(jnp.maximum(sumsq, 1e-24))
    proj = (jnp.sum(h_lo * fcwl_ref[...], axis=1, keepdims=True)
            + jnp.sum(h_hi * fcwh_ref[...], axis=1, keepdims=True))
    # NOTE: padded batch rows produce garbage here and are sliced off by the
    # wrapper; nothing depends on the padding being zero.
    o_ref[...] = (proj * inv_norm + fcb_ref[...]).astype(o_ref.dtype)


def gs_fused(e1_jm, e2m_jm, w):
    """e1_jm, e2m_jm: (S, B, 64) bf16 in neighbour-major order."""
    s, b, d = e1_jm.shape
    h = AGG_DIM
    tm, b_pad = _row_tile(b)
    e1p = _pad_axis(e1_jm, 1, b_pad)
    e2p = _pad_axis(e2m_jm, 1, b_pad)

    row3 = lambda i: (0, i, 0)
    cst = lambda i: (0, 0)

    out = pl.pallas_call(
        gs_fused_kernel,
        out_shape=jax.ShapeDtypeStruct((b_pad, 1), jnp.float32),
        grid=(b_pad // tm,),
        in_specs=[
            pl.BlockSpec((s, tm, d), row3),      # e1  (level-1 embeddings)
            pl.BlockSpec((s, tm, d), row3),      # e2m (pre-averaged level-2)
            pl.BlockSpec((d, h), cst),           # wx1 (prep folded), VMEM-res.
            pl.BlockSpec((d, h), cst),           # wn1 (prep folded)
            pl.BlockSpec((1, h), cst),           # bx1
            pl.BlockSpec((1, h), cst),           # bn1
            pl.BlockSpec((h, h), cst),           # agg2 wx, neighbour half
            pl.BlockSpec((1, h), cst),           # cx2 (constant dummy/x half)
            pl.BlockSpec((h, h), cst),           # agg2 wn, lower half
            pl.BlockSpec((h, h), cst),           # agg2 wn, upper half
            pl.BlockSpec((1, h), cst),           # fc weight, lower half
            pl.BlockSpec((1, h), cst),           # fc weight, upper half
            pl.BlockSpec((1, 1), cst),           # fc bias
        ],
        out_specs=pl.BlockSpec((tm, 1), lambda i: (i, 0)),
        compiler_params=pltpu.CompilerParams(
            dimension_semantics=("parallel",),
            vmem_limit_bytes=VMEM_LIMIT),
    )(e1p, e2p, w["wx1"], w["wn1"], w["bx1"], w["bn1"],
      w["wx2_hi"], w["cx2"], w["wn2_lo"], w["wn2_hi"],
      w["fcw_lo"], w["fcw_hi"], w["fcb"])
    return out[:b]


# --------------------------- host-side weight folds --------------------------

def fold_params(params):
    """Fold the affine prep Linear into the agg1 weights (exact in f32) and
    precompute the batch-independent dummy-node path of agg2.
    NOTE: relies on prep being purely affine (same invariant as the level-2
    mean hoist); revisit if a nonlinearity is ever added to prep."""
    f32, bf16 = jnp.float32, jnp.bfloat16
    h = AGG_DIM
    pw = params["prep_w_t"].astype(f32)                    # (64, 64)
    pb = params["prep_b"].astype(f32)                      # (64,)
    wx1 = pw @ params["agg1_wx_t"].astype(f32)             # (64, 128)
    wn1 = pw @ params["agg1_wn_t"].astype(f32)
    bx1 = pb @ params["agg1_wx_t"].astype(f32)             # (128,)
    bn1 = pb @ params["agg1_wn_t"].astype(f32)

    # a0 x-branch: prep(dummy) -> agg1 fc_x -> relu -> agg2 fc_x (first half),
    # computed once in f32 (it is identical for every batch row).
    e_dummy = params["embedding"][-1].astype(f32)          # (64,)
    a0x = jnp.maximum(e_dummy @ wx1 + bx1, 0.0)            # (128,)
    wx2 = params["agg2_wx_t"].astype(f32)                  # (256, 128)
    cx2 = a0x @ wx2[:h, :]                                 # (128,)

    wn2 = params["agg2_wn_t"].astype(f32)                  # (256, 128)
    fcw = params["fc_w_t"].astype(f32).reshape(-1)         # (256,)
    return {
        "wx1": wx1.astype(bf16), "wn1": wn1.astype(bf16),
        "bx1": bx1.reshape(1, h), "bn1": bn1.reshape(1, h),
        "wx2_hi": wx2[h:, :].astype(bf16), "cx2": cx2.reshape(1, h),
        "wn2_lo": wn2[:h, :].astype(bf16), "wn2_hi": wn2[h:, :].astype(bf16),
        "fcw_lo": fcw[:h].reshape(1, h), "fcw_hi": fcw[h:].reshape(1, h),
        "fcb": params["fc_b"].astype(f32).reshape(1, 1),
    }


# --------------------------- model (glue in JAX) ------------------------------

def uniform_neighbor_sampler(key, ids, adj, n_samples):
    # tmp = adj[ids]; permute columns; take first n_samples  (== reference)
    tmp = adj[ids]
    perm = jax.random.permutation(key, tmp.shape[1])
    return tmp[:, perm][:, :n_samples]


def init_params(key, n_nodes):
    ks = jax.random.split(key, 9)
    scale = 0.1
    return {
        "embedding": scale * jax.random.normal(ks[0], (n_nodes + 1, EMB_DIM), jnp.float32),
        "prep_w_t":  scale * jax.random.normal(ks[1], (EMB_DIM, EMB_DIM), jnp.float32),
        "prep_b":    scale * jax.random.normal(ks[2], (EMB_DIM,), jnp.float32),
        # agg layer 1: input_dim=64, output_dim=128 (relu)
        "agg1_wx_t": scale * jax.random.normal(ks[3], (EMB_DIM, AGG_DIM), jnp.float32),
        "agg1_wn_t": scale * jax.random.normal(ks[4], (EMB_DIM, AGG_DIM), jnp.float32),
        # agg layer 2: input_dim=256 (concat), output_dim=128 (identity)
        "agg2_wx_t": scale * jax.random.normal(ks[5], (2 * AGG_DIM, AGG_DIM), jnp.float32),
        "agg2_wn_t": scale * jax.random.normal(ks[6], (2 * AGG_DIM, AGG_DIM), jnp.float32),
        # final fc: 256 -> 1 with bias
        "fc_w_t":    scale * jax.random.normal(ks[7], (2 * AGG_DIM, 1), jnp.float32),
        "fc_b":      scale * jax.random.normal(ks[8], (1,), jnp.float32),
    }


def gs_supervised_forward(params, ids, adj, sample_key):
    emb = params["embedding"]
    b = ids.shape[0]
    s = N_SAMPLES

    # --- neighbour sampling + embedding gathers (data-dependent; plain JAX) ---
    k1, k2 = jax.random.split(sample_key)
    ids1 = uniform_neighbor_sampler(k1, ids, adj, s)                  # (B, S)
    ids2 = uniform_neighbor_sampler(k2, ids1.reshape(-1), adj, s)     # (B*S, S)

    # Neighbour-major ("j-major") layout: grouped means inside the kernel are
    # sums over the leading axis (whole-slab adds, no relayout).  Only the tiny
    # index arrays are transposed; the gathers land directly in this order.
    ids1_jm = ids1.T                                                  # (S, B)
    ids2_jm = ids2.reshape(b, s, s).transpose(1, 0, 2)                # (S, B, S)

    e1_jm = emb[ids1_jm].astype(jnp.bfloat16)                         # (S, B, 64)
    # Level-2 mean hoisted in front of the (affine, folded) prep Linear.
    # TODO(synk): stream this gather+mean through a Pallas kernel (scalar-
    # prefetched ids + manual DMA row gather) to cut the deepest-level HBM
    # traffic instead of materializing the full (S,B,S,64) gather in XLA.
    e2m_jm = emb[ids2_jm].mean(axis=2).astype(jnp.bfloat16)           # (S, B, 64)

    return gs_fused(e1_jm, e2m_jm, fold_params(params))               # (B, 1) f32


# Pure-f32 reference of the ORIGINAL module math (no fold, no fusion, no bf16)
def _reference_forward(params, ids, adj, sample_key):
    emb = params["embedding"]
    n_nodes = emb.shape[0] - 1

    def lin(x, wt, b):
        return x @ wt + b

    dummy = jnp.broadcast_to(emb[n_nodes], (ids.shape[0], EMB_DIM))
    f0 = lin(dummy, params["prep_w_t"], params["prep_b"])
    k1, k2 = jax.random.split(sample_key)
    ids1 = uniform_neighbor_sampler(k1, ids, adj, N_SAMPLES).reshape(-1)
    f1 = lin(emb[ids1], params["prep_w_t"], params["prep_b"])
    ids2 = uniform_neighbor_sampler(k2, ids1, adj, N_SAMPLES).reshape(-1)
    f2 = lin(emb[ids2], params["prep_w_t"], params["prep_b"])
    feats = [f0, f1, f2]
    for name, relu in [("agg1", True), ("agg2", False)]:
        new = []
        for k in range(len(feats) - 1):
            x = feats[k]
            nb = feats[k + 1].reshape(x.shape[0], -1, feats[k + 1].shape[1]).mean(axis=1)
            out = jnp.concatenate(
                [x @ params[name + "_wx_t"], nb @ params[name + "_wn_t"]], axis=1)
            if relu:
                out = jnp.maximum(out, 0.0)
            new.append(out)
        feats = new
    x = feats[0]
    nrm = jnp.maximum(jnp.sqrt(jnp.sum(x * x, axis=1, keepdims=True)), 1e-12)
    return (x / nrm) @ params["fc_w_t"] + params["fc_b"].reshape(1, -1)


# ---------------------------------- main --------------------------------------

if __name__ == "__main__":
    key = jax.random.PRNGKey(0)
    k_param, k_adj, k_sample = jax.random.split(key, 3)

    n_nodes = 10
    max_degree = 32            # >= 25 so n_samples=25 is honored
    batch = 2

    params = init_params(k_param, n_nodes)
    adj = jax.random.randint(k_adj, (n_nodes, max_degree), 0, n_nodes, dtype=jnp.int32)
    ids = jnp.array([1, 3], dtype=jnp.int32)
    assert ids.shape[0] == batch

    out = gs_supervised_forward(params, ids, adj, k_sample)
    out = jax.block_until_ready(out)
    assert out.shape == (batch, 1), out.shape

    ref = _reference_forward(params, ids, adj, k_sample)
    # bf16 matmul operands (f32 accumulation) + folded weights -> loose tol
    assert jnp.allclose(out, ref, rtol=2e-2, atol=2e-2), (out, ref)

    print("KERNEL_OK")
</pallas_src>

<mosaic_0001>
module attributes {stable_mosaic.version = 11 : i64} {
  func.func @gs_fused_kernel(%arg0: i32, %arg1: memref<25x16x64xbf16, #tpu.memory_space<vmem>>, %arg2: memref<25x16x64xbf16, #tpu.memory_space<vmem>>, %arg3: memref<64x128xbf16, #tpu.memory_space<vmem>>, %arg4: memref<64x128xbf16, #tpu.memory_space<vmem>>, %arg5: memref<1x128xf32, #tpu.memory_space<vmem>>, %arg6: memref<1x128xf32, #tpu.memory_space<vmem>>, %arg7: memref<128x128xbf16, #tpu.memory_space<vmem>>, %arg8: memref<1x128xf32, #tpu.memory_space<vmem>>, %arg9: memref<128x128xbf16, #tpu.memory_space<vmem>>, %arg10: memref<128x128xbf16, #tpu.memory_space<vmem>>, %arg11: memref<1x128xf32, #tpu.memory_space<vmem>>, %arg12: memref<1x128xf32, #tpu.memory_space<vmem>>, %arg13: memref<1x1xf32, #tpu.memory_space<vmem>>, %arg14: memref<16x1xf32, #tpu.memory_space<vmem>>) attributes {dimension_semantics = [#tpu.dimension_semantics<parallel>], iteration_bounds = array<i64: 1>, scalar_prefetch = 0 : i64, scratch_operands = 0 : i64, tpu.core_type = #tpu.core_type<tc>, window_params = [{transform_indices = @transform_0, window_bounds = array<i64: 25, 16, 64>}, {transform_indices = @transform_1, window_bounds = array<i64: 25, 16, 64>}, {pipeline_mode = #tpu.pipeline_mode<synchronous>, transform_indices = @transform_2, window_bounds = array<i64: 64, 128>}, {pipeline_mode = #tpu.pipeline_mode<synchronous>, transform_indices = @transform_3, window_bounds = array<i64: 64, 128>}, {pipeline_mode = #tpu.pipeline_mode<synchronous>, transform_indices = @transform_4, window_bounds = array<i64: 1, 128>}, {pipeline_mode = #tpu.pipeline_mode<synchronous>, transform_indices = @transform_5, window_bounds = array<i64: 1, 128>}, {pipeline_mode = #tpu.pipeline_mode<synchronous>, transform_indices = @transform_6, window_bounds = array<i64: 128, 128>}, {pipeline_mode = #tpu.pipeline_mode<synchronous>, transform_indices = @transform_7, window_bounds = array<i64: 1, 128>}, {pipeline_mode = #tpu.pipeline_mode<synchronous>, transform_indices = @transform_8, window_bounds = array<i64: 128, 128>}, {pipeline_mode = #tpu.pipeline_mode<synchronous>, transform_indices = @transform_9, window_bounds = array<i64: 128, 128>}, {pipeline_mode = #tpu.pipeline_mode<synchronous>, transform_indices = @transform_10, window_bounds = array<i64: 1, 128>}, {pipeline_mode = #tpu.pipeline_mode<synchronous>, transform_indices = @transform_11, window_bounds = array<i64: 1, 128>}, {pipeline_mode = #tpu.pipeline_mode<synchronous>, transform_indices = @transform_12, window_bounds = array<i64: 1, 1>}, {transform_indices = @transform_13, window_bounds = array<i64: 16, 1>}]} {
    %c0 = arith.constant 0 : index
    %c0_0 = arith.constant 0 : index
    %c0_1 = arith.constant 0 : index
    %0 = vector.load %arg1[%c0, %c0_0, %c0_1] : memref<25x16x64xbf16, #tpu.memory_space<vmem>>, vector<25x16x64xbf16>
    %c0_2 = arith.constant 0 : index
    %c0_3 = arith.constant 0 : index
    %c0_4 = arith.constant 0 : index
    %1 = vector.load %arg2[%c0_2, %c0_3, %c0_4] : memref<25x16x64xbf16, #tpu.memory_space<vmem>>, vector<25x16x64xbf16>
    %2 = vector.shape_cast %0 : vector<25x16x64xbf16> to vector<400x64xbf16>
    %3 = vector.shape_cast %1 : vector<25x16x64xbf16> to vector<400x64xbf16>
    %c0_5 = arith.constant 0 : index
    %c0_6 = arith.constant 0 : index
    %4 = vector.load %arg5[%c0_5, %c0_6] : memref<1x128xf32, #tpu.memory_space<vmem>>, vector<1x128xf32>
    %c0_7 = arith.constant 0 : index
    %c0_8 = arith.constant 0 : index
    %5 = vector.load %arg3[%c0_7, %c0_8] : memref<64x128xbf16, #tpu.memory_space<vmem>>, vector<64x128xbf16>
    %cst = arith.constant dense<0.000000e+00> : vector<400x128xf32>
    %6 = tpu.matmul %2, %5, %cst {dimension_numbers = #tpu.dot_dimension_numbers<[1], [0], [0], [1], [0, 0, 1, 1], [], []>} : vector<400x64xbf16>, vector<64x128xbf16>, vector<400x128xf32> -> vector<400x128xf32>
    %7 = vector.extract_strided_slice %6 {offsets = [0, 0], sizes = [16, 128], strides = [1, 1]} : vector<400x128xf32> to vector<16x128xf32>
    %8 = vector.broadcast %4 : vector<1x128xf32> to vector<16x128xf32>
    %9 = arith.addf %7, %8 : vector<16x128xf32>
    %cst_9 = arith.constant 0.000000e+00 : f32
    %10 = vector.broadcast %cst_9 : f32 to vector<16x128xf32>
    %11 = arith.maximumf %9, %10 : vector<16x128xf32>
    %12 = vector.extract_strided_slice %6 {offsets = [16, 0], sizes = [16, 128], strides = [1, 1]} : vector<400x128xf32> to vector<16x128xf32>
    %13 = vector.broadcast %4 : vector<1x128xf32> to vector<16x128xf32>
    %14 = arith.addf %12, %13 : vector<16x128xf32>
    %cst_10 = arith.constant 0.000000e+00 : f32
    %15 = vector.broadcast %cst_10 : f32 to vector<16x128xf32>
    %16 = arith.maximumf %14, %15 : vector<16x128xf32>
    %17 = arith.addf %11, %16 : vector<16x128xf32>
    %18 = vector.extract_strided_slice %6 {offsets = [32, 0], sizes = [16, 128], strides = [1, 1]} : vector<400x128xf32> to vector<16x128xf32>
    %19 = vector.broadcast %4 : vector<1x128xf32> to vector<16x128xf32>
    %20 = arith.addf %18, %19 : vector<16x128xf32>
    %cst_11 = arith.constant 0.000000e+00 : f32
    %21 = vector.broadcast %cst_11 : f32 to vector<16x128xf32>
    %22 = arith.maximumf %20, %21 : vector<16x128xf32>
    %23 = arith.addf %17, %22 : vector<16x128xf32>
    %24 = vector.extract_strided_slice %6 {offsets = [48, 0], sizes = [16, 128], strides = [1, 1]} : vector<400x128xf32> to vector<16x128xf32>
    %25 = vector.broadcast %4 : vector<1x128xf32> to vector<16x128xf32>
    %26 = arith.addf %24, %25 : vector<16x128xf32>
    %cst_12 = arith.constant 0.000000e+00 : f32
    %27 = vector.broadcast %cst_12 : f32 to vector<16x128xf32>
    %28 = arith.maximumf %26, %27 : vector<16x128xf32>
    %29 = arith.addf %23, %28 : vector<16x128xf32>
    %30 = vector.extract_strided_slice %6 {offsets = [64, 0], sizes = [16, 128], strides = [1, 1]} : vector<400x128xf32> to vector<16x128xf32>
    %31 = vector.broadcast %4 : vector<1x128xf32> to vector<16x128xf32>
    %32 = arith.addf %30, %31 : vector<16x128xf32>
    %cst_13 = arith.constant 0.000000e+00 : f32
    %33 = vector.broadcast %cst_13 : f32 to vector<16x128xf32>
    %34 = arith.maximumf %32, %33 : vector<16x128xf32>
    %35 = arith.addf %29, %34 : vector<16x128xf32>
    %36 = vector.extract_strided_slice %6 {offsets = [80, 0], sizes = [16, 128], strides = [1, 1]} : vector<400x128xf32> to vector<16x128xf32>
    %37 = vector.broadcast %4 : vector<1x128xf32> to vector<16x128xf32>
    %38 = arith.addf %36, %37 : vector<16x128xf32>
    %cst_14 = arith.constant 0.000000e+00 : f32
    %39 = vector.broadcast %cst_14 : f32 to vector<16x128xf32>
    %40 = arith.maximumf %38, %39 : vector<16x128xf32>
    %41 = arith.addf %35, %40 : vector<16x128xf32>
    %42 = vector.extract_strided_slice %6 {offsets = [96, 0], sizes = [16, 128], strides = [1, 1]} : vector<400x128xf32> to vector<16x128xf32>
    %43 = vector.broadcast %4 : vector<1x128xf32> to vector<16x128xf32>
    %44 = arith.addf %42, %43 : vector<16x128xf32>
    %cst_15 = arith.constant 0.000000e+00 : f32
    %45 = vector.broadcast %cst_15 : f32 to vector<16x128xf32>
    %46 = arith.maximumf %44, %45 : vector<16x128xf32>
    %47 = arith.addf %41, %46 : vector<16x128xf32>
    %48 = vector.extract_strided_slice %6 {offsets = [112, 0], sizes = [16, 128], strides = [1, 1]} : vector<400x128xf32> to vector<16x128xf32>
    %49 = vector.broadcast %4 : vector<1x128xf32> to vector<16x128xf32>
    %50 = arith.addf %48, %49 : vector<16x128xf32>
    %cst_16 = arith.constant 0.000000e+00 : f32
    %51 = vector.broadcast %cst_16 : f32 to vector<16x128xf32>
    %52 = arith.maximumf %50, %51 : vector<16x128xf32>
    %53 = arith.addf %47, %52 : vector<16x128xf32>
    %54 = vector.extract_strided_slice %6 {offsets = [128, 0], sizes = [16, 128], strides = [1, 1]} : vector<400x128xf32> to vector<16x128xf32>
    %55 = vector.broadcast %4 : vector<1x128xf32> to vector<16x128xf32>
    %56 = arith.addf %54, %55 : vector<16x128xf32>
    %cst_17 = arith.constant 0.000000e+00 : f32
    %57 = vector.broadcast %cst_17 : f32 to vector<16x128xf32>
    %58 = arith.maximumf %56, %57 : vector<16x128xf32>
    %59 = arith.addf %53, %58 : vector<16x128xf32>
    %60 = vector.extract_strided_slice %6 {offsets = [144, 0], sizes = [16, 128], strides = [1, 1]} : vector<400x128xf32> to vector<16x128xf32>
    %61 = vector.broadcast %4 : vector<1x128xf32> to vector<16x128xf32>
    %62 = arith.addf %60, %61 : vector<16x128xf32>
    %cst_18 = arith.constant 0.000000e+00 : f32
    %63 = vector.broadcast %cst_18 : f32 to vector<16x128xf32>
    %64 = arith.maximumf %62, %63 : vector<16x128xf32>
    %65 = arith.addf %59, %64 : vector<16x128xf32>
    %66 = vector.extract_strided_slice %6 {offsets = [160, 0], sizes = [16, 128], strides = [1, 1]} : vector<400x128xf32> to vector<16x128xf32>
    %67 = vector.broadcast %4 : vector<1x128xf32> to vector<16x128xf32>
    %68 = arith.addf %66, %67 : vector<16x128xf32>
    %cst_19 = arith.constant 0.000000e+00 : f32
    %69 = vector.broadcast %cst_19 : f32 to vector<16x128xf32>
    %70 = arith.maximumf %68, %69 : vector<16x128xf32>
    %71 = arith.addf %65, %70 : vector<16x128xf32>
    %72 = vector.extract_strided_slice %6 {offsets = [176, 0], sizes = [16, 128], strides = [1, 1]} : vector<400x128xf32> to vector<16x128xf32>
    %73 = vector.broadcast %4 : vector<1x128xf32> to vector<16x128xf32>
    %74 = arith.addf %72, %73 : vector<16x128xf32>
    %cst_20 = arith.constant 0.000000e+00 : f32
    %75 = vector.broadcast %cst_20 : f32 to vector<16x128xf32>
    %76 = arith.maximumf %74, %75 : vector<16x128xf32>
    %77 = arith.addf %71, %76 : vector<16x128xf32>
    %78 = vector.extract_strided_slice %6 {offsets = [192, 0], sizes = [16, 128], strides = [1, 1]} : vector<400x128xf32> to vector<16x128xf32>
    %79 = vector.broadcast %4 : vector<1x128xf32> to vector<16x128xf32>
    %80 = arith.addf %78, %79 : vector<16x128xf32>
    %cst_21 = arith.constant 0.000000e+00 : f32
    %81 = vector.broadcast %cst_21 : f32 to vector<16x128xf32>
    %82 = arith.maximumf %80, %81 : vector<16x128xf32>
    %83 = arith.addf %77, %82 : vector<16x128xf32>
    %84 = vector.extract_strided_slice %6 {offsets = [208, 0], sizes = [16, 128], strides = [1, 1]} : vector<400x128xf32> to vector<16x128xf32>
    %85 = vector.broadcast %4 : vector<1x128xf32> to vector<16x128xf32>
    %86 = arith.addf %84, %85 : vector<16x128xf32>
    %cst_22 = arith.constant 0.000000e+00 : f32
    %87 = vector.broadcast %cst_22 : f32 to vector<16x128xf32>
    %88 = arith.maximumf %86, %87 : vector<16x128xf32>
    %89 = arith.addf %83, %88 : vector<16x128xf32>
    %90 = vector.extract_strided_slice %6 {offsets = [224, 0], sizes = [16, 128], strides = [1, 1]} : vector<400x128xf32> to vector<16x128xf32>
    %91 = vector.broadcast %4 : vector<1x128xf32> to vector<16x128xf32>
    %92 = arith.addf %90, %91 : vector<16x128xf32>
    %cst_23 = arith.constant 0.000000e+00 : f32
    %93 = vector.broadcast %cst_23 : f32 to vector<16x128xf32>
    %94 = arith.maximumf %92, %93 : vector<16x128xf32>
    %95 = arith.addf %89, %94 : vector<16x128xf32>
    %96 = vector.extract_strided_slice %6 {offsets = [240, 0], sizes = [16, 128], strides = [1, 1]} : vector<400x128xf32> to vector<16x128xf32>
    %97 = vector.broadcast %4 : vector<1x128xf32> to vector<16x128xf32>
    %98 = arith.addf %96, %97 : vector<16x128xf32>
    %cst_24 = arith.constant 0.000000e+00 : f32
    %99 = vector.broadcast %cst_24 : f32 to vector<16x128xf32>
    %100 = arith.maximumf %98, %99 : vector<16x128xf32>
    %101 = arith.addf %95, %100 : vector<16x128xf32>
    %102 = vector.extract_strided_slice %6 {offsets = [256, 0], sizes = [16, 128], strides = [1, 1]} : vector<400x128xf32> to vector<16x128xf32>
    %103 = vector.broadcast %4 : vector<1x128xf32> to vector<16x128xf32>
    %104 = arith.addf %102, %103 : vector<16x128xf32>
    %cst_25 = arith.constant 0.000000e+00 : f32
    %105 = vector.broadcast %cst_25 : f32 to vector<16x128xf32>
    %106 = arith.maximumf %104, %105 : vector<16x128xf32>
    %107 = arith.addf %101, %106 : vector<16x128xf32>
    %108 = vector.extract_strided_slice %6 {offsets = [272, 0], sizes = [16, 128], strides = [1, 1]} : vector<400x128xf32> to vector<16x128xf32>
    %109 = vector.broadcast %4 : vector<1x128xf32> to vector<16x128xf32>
    %110 = arith.addf %108, %109 : vector<16x128xf32>
    %cst_26 = arith.constant 0.000000e+00 : f32
    %111 = vector.broadcast %cst_26 : f32 to vector<16x128xf32>
    %112 = arith.maximumf %110, %111 : vector<16x128xf32>
    %113 = arith.addf %107, %112 : vector<16x128xf32>
    %114 = vector.extract_strided_slice %6 {offsets = [288, 0], sizes = [16, 128], strides = [1, 1]} : vector<400x128xf32> to vector<16x128xf32>
    %115 = vector.broadcast %4 : vector<1x128xf32> to vector<16x128xf32>
    %116 = arith.addf %114, %115 : vector<16x128xf32>
    %cst_27 = arith.constant 0.000000e+00 : f32
    %117 = vector.broadcast %cst_27 : f32 to vector<16x128xf32>
    %118 = arith.maximumf %116, %117 : vector<16x128xf32>
    %119 = arith.addf %113, %118 : vector<16x128xf32>
    %120 = vector.extract_strided_slice %6 {offsets = [304, 0], sizes = [16, 128], strides = [1, 1]} : vector<400x128xf32> to vector<16x128xf32>
    %121 = vector.broadcast %4 : vector<1x128xf32> to vector<16x128xf32>
    %122 = arith.addf %120, %121 : vector<16x128xf32>
    %cst_28 = arith.constant 0.000000e+00 : f32
    %123 = vector.broadcast %cst_28 : f32 to vector<16x128xf32>
    %124 = arith.maximumf %122, %123 : vector<16x128xf32>
    %125 = arith.addf %119, %124 : vector<16x128xf32>
    %126 = vector.extract_strided_slice %6 {offsets = [320, 0], sizes = [16, 128], strides = [1, 1]} : vector<400x128xf32> to vector<16x128xf32>
    %127 = vector.broadcast %4 : vector<1x128xf32> to vector<16x128xf32>
    %128 = arith.addf %126, %127 : vector<16x128xf32>
    %cst_29 = arith.constant 0.000000e+00 : f32
    %129 = vector.broadcast %cst_29 : f32 to vector<16x128xf32>
    %130 = arith.maximumf %128, %129 : vector<16x128xf32>
    %131 = arith.addf %125, %130 : vector<16x128xf32>
    %132 = vector.extract_strided_slice %6 {offsets = [336, 0], sizes = [16, 128], strides = [1, 1]} : vector<400x128xf32> to vector<16x128xf32>
    %133 = vector.broadcast %4 : vector<1x128xf32> to vector<16x128xf32>
    %134 = arith.addf %132, %133 : vector<16x128xf32>
    %cst_30 = arith.constant 0.000000e+00 : f32
    %135 = vector.broadcast %cst_30 : f32 to vector<16x128xf32>
    %136 = arith.maximumf %134, %135 : vector<16x128xf32>
    %137 = arith.addf %131, %136 : vector<16x128xf32>
    %138 = vector.extract_strided_slice %6 {offsets = [352, 0], sizes = [16, 128], strides = [1, 1]} : vector<400x128xf32> to vector<16x128xf32>
    %139 = vector.broadcast %4 : vector<1x128xf32> to vector<16x128xf32>
    %140 = arith.addf %138, %139 : vector<16x128xf32>
    %cst_31 = arith.constant 0.000000e+00 : f32
    %141 = vector.broadcast %cst_31 : f32 to vector<16x128xf32>
    %142 = arith.maximumf %140, %141 : vector<16x128xf32>
    %143 = arith.addf %137, %142 : vector<16x128xf32>
    %144 = vector.extract_strided_slice %6 {offsets = [368, 0], sizes = [16, 128], strides = [1, 1]} : vector<400x128xf32> to vector<16x128xf32>
    %145 = vector.broadcast %4 : vector<1x128xf32> to vector<16x128xf32>
    %146 = arith.addf %144, %145 : vector<16x128xf32>
    %cst_32 = arith.constant 0.000000e+00 : f32
    %147 = vector.broadcast %cst_32 : f32 to vector<16x128xf32>
    %148 = arith.maximumf %146, %147 : vector<16x128xf32>
    %149 = arith.addf %143, %148 : vector<16x128xf32>
    %150 = vector.extract_strided_slice %6 {offsets = [384, 0], sizes = [16, 128], strides = [1, 1]} : vector<400x128xf32> to vector<16x128xf32>
    %151 = vector.broadcast %4 : vector<1x128xf32> to vector<16x128xf32>
    %152 = arith.addf %150, %151 : vector<16x128xf32>
    %cst_33 = arith.constant 0.000000e+00 : f32
    %153 = vector.broadcast %cst_33 : f32 to vector<16x128xf32>
    %154 = arith.maximumf %152, %153 : vector<16x128xf32>
    %155 = arith.addf %149, %154 : vector<16x128xf32>
    %cst_34 = arith.constant 4.000000e-02 : f32
    %156 = vector.broadcast %cst_34 : f32 to vector<16x128xf32>
    %157 = arith.mulf %155, %156 : vector<16x128xf32>
    %c0_35 = arith.constant 0 : index
    %c0_36 = arith.constant 0 : index
    %158 = vector.load %arg6[%c0_35, %c0_36] : memref<1x128xf32, #tpu.memory_space<vmem>>, vector<1x128xf32>
    %c0_37 = arith.constant 0 : index
    %c0_38 = arith.constant 0 : index
    %159 = vector.load %arg4[%c0_37, %c0_38] : memref<64x128xbf16, #tpu.memory_space<vmem>>, vector<64x128xbf16>
    %cst_39 = arith.constant dense<0.000000e+00> : vector<400x128xf32>
    %160 = tpu.matmul %3, %159, %cst_39 {dimension_numbers = #tpu.dot_dimension_numbers<[1], [0], [0], [1], [0, 0, 1, 1], [], []>} : vector<400x64xbf16>, vector<64x128xbf16>, vector<400x128xf32> -> vector<400x128xf32>
    %161 = vector.extract_strided_slice %160 {offsets = [0, 0], sizes = [16, 128], strides = [1, 1]} : vector<400x128xf32> to vector<16x128xf32>
    %162 = vector.broadcast %158 : vector<1x128xf32> to vector<16x128xf32>
    %163 = arith.addf %161, %162 : vector<16x128xf32>
    %cst_40 = arith.constant 0.000000e+00 : f32
    %164 = vector.broadcast %cst_40 : f32 to vector<16x128xf32>
    %165 = arith.maximumf %163, %164 : vector<16x128xf32>
    %166 = vector.extract_strided_slice %160 {offsets = [16, 0], sizes = [16, 128], strides = [1, 1]} : vector<400x128xf32> to vector<16x128xf32>
    %167 = vector.broadcast %158 : vector<1x128xf32> to vector<16x128xf32>
    %168 = arith.addf %166, %167 : vector<16x128xf32>
    %cst_41 = arith.constant 0.000000e+00 : f32
    %169 = vector.broadcast %cst_41 : f32 to vector<16x128xf32>
    %170 = arith.maximumf %168, %169 : vector<16x128xf32>
    %171 = arith.addf %165, %170 : vector<16x128xf32>
    %172 = vector.extract_strided_slice %160 {offsets = [32, 0], sizes = [16, 128], strides = [1, 1]} : vector<400x128xf32> to vector<16x128xf32>
    %173 = vector.broadcast %158 : vector<1x128xf32> to vector<16x128xf32>
    %174 = arith.addf %172, %173 : vector<16x128xf32>
    %cst_42 = arith.constant 0.000000e+00 : f32
    %175 = vector.broadcast %cst_42 : f32 to vector<16x128xf32>
    %176 = arith.maximumf %174, %175 : vector<16x128xf32>
    %177 = arith.addf %171, %176 : vector<16x128xf32>
    %178 = vector.extract_strided_slice %160 {offsets = [48, 0], sizes = [16, 128], strides = [1, 1]} : vector<400x128xf32> to vector<16x128xf32>
    %179 = vector.broadcast %158 : vector<1x128xf32> to vector<16x128xf32>
    %180 = arith.addf %178, %179 : vector<16x128xf32>
    %cst_43 = arith.constant 0.000000e+00 : f32
    %181 = vector.broadcast %cst_43 : f32 to vector<16x128xf32>
    %182 = arith.maximumf %180, %181 : vector<16x128xf32>
    %183 = arith.addf %177, %182 : vector<16x128xf32>
    %184 = vector.extract_strided_slice %160 {offsets = [64, 0], sizes = [16, 128], strides = [1, 1]} : vector<400x128xf32> to vector<16x128xf32>
    %185 = vector.broadcast %158 : vector<1x128xf32> to vector<16x128xf32>
    %186 = arith.addf %184, %185 : vector<16x128xf32>
    %cst_44 = arith.constant 0.000000e+00 : f32
    %187 = vector.broadcast %cst_44 : f32 to vector<16x128xf32>
    %188 = arith.maximumf %186, %187 : vector<16x128xf32>
    %189 = arith.addf %183, %188 : vector<16x128xf32>
    %190 = vector.extract_strided_slice %160 {offsets = [80, 0], sizes = [16, 128], strides = [1, 1]} : vector<400x128xf32> to vector<16x128xf32>
    %191 = vector.broadcast %158 : vector<1x128xf32> to vector<16x128xf32>
    %192 = arith.addf %190, %191 : vector<16x128xf32>
    %cst_45 = arith.constant 0.000000e+00 : f32
    %193 = vector.broadcast %cst_45 : f32 to vector<16x128xf32>
    %194 = arith.maximumf %192, %193 : vector<16x128xf32>
    %195 = arith.addf %189, %194 : vector<16x128xf32>
    %196 = vector.extract_strided_slice %160 {offsets = [96, 0], sizes = [16, 128], strides = [1, 1]} : vector<400x128xf32> to vector<16x128xf32>
    %197 = vector.broadcast %158 : vector<1x128xf32> to vector<16x128xf32>
    %198 = arith.addf %196, %197 : vector<16x128xf32>
    %cst_46 = arith.constant 0.000000e+00 : f32
    %199 = vector.broadcast %cst_46 : f32 to vector<16x128xf32>
    %200 = arith.maximumf %198, %199 : vector<16x128xf32>
    %201 = arith.addf %195, %200 : vector<16x128xf32>
    %202 = vector.extract_strided_slice %160 {offsets = [112, 0], sizes = [16, 128], strides = [1, 1]} : vector<400x128xf32> to vector<16x128xf32>
    %203 = vector.broadcast %158 : vector<1x128xf32> to vector<16x128xf32>
    %204 = arith.addf %202, %203 : vector<16x128xf32>
    %cst_47 = arith.constant 0.000000e+00 : f32
    %205 = vector.broadcast %cst_47 : f32 to vector<16x128xf32>
    %206 = arith.maximumf %204, %205 : vector<16x128xf32>
    %207 = arith.addf %201, %206 : vector<16x128xf32>
    %208 = vector.extract_strided_slice %160 {offsets = [128, 0], sizes = [16, 128], strides = [1, 1]} : vector<400x128xf32> to vector<16x128xf32>
    %209 = vector.broadcast %158 : vector<1x128xf32> to vector<16x128xf32>
    %210 = arith.addf %208, %209 : vector<16x128xf32>
    %cst_48 = arith.constant 0.000000e+00 : f32
    %211 = vector.broadcast %cst_48 : f32 to vector<16x128xf32>
    %212 = arith.maximumf %210, %211 : vector<16x128xf32>
    %213 = arith.addf %207, %212 : vector<16x128xf32>
    %214 = vector.extract_strided_slice %160 {offsets = [144, 0], sizes = [16, 128], strides = [1, 1]} : vector<400x128xf32> to vector<16x128xf32>
    %215 = vector.broadcast %158 : vector<1x128xf32> to vector<16x128xf32>
    %216 = arith.addf %214, %215 : vector<16x128xf32>
    %cst_49 = arith.constant 0.000000e+00 : f32
    %217 = vector.broadcast %cst_49 : f32 to vector<16x128xf32>
    %218 = arith.maximumf %216, %217 : vector<16x128xf32>
    %219 = arith.addf %213, %218 : vector<16x128xf32>
    %220 = vector.extract_strided_slice %160 {offsets = [160, 0], sizes = [16, 128], strides = [1, 1]} : vector<400x128xf32> to vector<16x128xf32>
    %221 = vector.broadcast %158 : vector<1x128xf32> to vector<16x128xf32>
    %222 = arith.addf %220, %221 : vector<16x128xf32>
    %cst_50 = arith.constant 0.000000e+00 : f32
    %223 = vector.broadcast %cst_50 : f32 to vector<16x128xf32>
    %224 = arith.maximumf %222, %223 : vector<16x128xf32>
    %225 = arith.addf %219, %224 : vector<16x128xf32>
    %226 = vector.extract_strided_slice %160 {offsets = [176, 0], sizes = [16, 128], strides = [1, 1]} : vector<400x128xf32> to vector<16x128xf32>
    %227 = vector.broadcast %158 : vector<1x128xf32> to vector<16x128xf32>
    %228 = arith.addf %226, %227 : vector<16x128xf32>
    %cst_51 = arith.constant 0.000000e+00 : f32
    %229 = vector.broadcast %cst_51 : f32 to vector<16x128xf32>
    %230 = arith.maximumf %228, %229 : vector<16x128xf32>
    %231 = arith.addf %225, %230 : vector<16x128xf32>
    %232 = vector.extract_strided_slice %160 {offsets = [192, 0], sizes = [16, 128], strides = [1, 1]} : vector<400x128xf32> to vector<16x128xf32>
    %233 = vector.broadcast %158 : vector<1x128xf32> to vector<16x128xf32>
    %234 = arith.addf %232, %233 : vector<16x128xf32>
    %cst_52 = arith.constant 0.000000e+00 : f32
    %235 = vector.broadcast %cst_52 : f32 to vector<16x128xf32>
    %236 = arith.maximumf %234, %235 : vector<16x128xf32>
    %237 = arith.addf %231, %236 : vector<16x128xf32>
    %238 = vector.extract_strided_slice %160 {offsets = [208, 0], sizes = [16, 128], strides = [1, 1]} : vector<400x128xf32> to vector<16x128xf32>
    %239 = vector.broadcast %158 : vector<1x128xf32> to vector<16x128xf32>
    %240 = arith.addf %238, %239 : vector<16x128xf32>
    %cst_53 = arith.constant 0.000000e+00 : f32
    %241 = vector.broadcast %cst_53 : f32 to vector<16x128xf32>
    %242 = arith.maximumf %240, %241 : vector<16x128xf32>
    %243 = arith.addf %237, %242 : vector<16x128xf32>
    %244 = vector.extract_strided_slice %160 {offsets = [224, 0], sizes = [16, 128], strides = [1, 1]} : vector<400x128xf32> to vector<16x128xf32>
    %245 = vector.broadcast %158 : vector<1x128xf32> to vector<16x128xf32>
    %246 = arith.addf %244, %245 : vector<16x128xf32>
    %cst_54 = arith.constant 0.000000e+00 : f32
    %247 = vector.broadcast %cst_54 : f32 to vector<16x128xf32>
    %248 = arith.maximumf %246, %247 : vector<16x128xf32>
    %249 = arith.addf %243, %248 : vector<16x128xf32>
    %250 = vector.extract_strided_slice %160 {offsets = [240, 0], sizes = [16, 128], strides = [1, 1]} : vector<400x128xf32> to vector<16x128xf32>
    %251 = vector.broadcast %158 : vector<1x128xf32> to vector<16x128xf32>
    %252 = arith.addf %250, %251 : vector<16x128xf32>
    %cst_55 = arith.constant 0.000000e+00 : f32
    %253 = vector.broadcast %cst_55 : f32 to vector<16x128xf32>
    %254 = arith.maximumf %252, %253 : vector<16x128xf32>
    %255 = arith.addf %249, %254 : vector<16x128xf32>
    %256 = vector.extract_strided_slice %160 {offsets = [256, 0], sizes = [16, 128], strides = [1, 1]} : vector<400x128xf32> to vector<16x128xf32>
    %257 = vector.broadcast %158 : vector<1x128xf32> to vector<16x128xf32>
    %258 = arith.addf %256, %257 : vector<16x128xf32>
    %cst_56 = arith.constant 0.000000e+00 : f32
    %259 = vector.broadcast %cst_56 : f32 to vector<16x128xf32>
    %260 = arith.maximumf %258, %259 : vector<16x128xf32>
    %261 = arith.addf %255, %260 : vector<16x128xf32>
    %262 = vector.extract_strided_slice %160 {offsets = [272, 0], sizes = [16, 128], strides = [1, 1]} : vector<400x128xf32> to vector<16x128xf32>
    %263 = vector.broadcast %158 : vector<1x128xf32> to vector<16x128xf32>
    %264 = arith.addf %262, %263 : vector<16x128xf32>
    %cst_57 = arith.constant 0.000000e+00 : f32
    %265 = vector.broadcast %cst_57 : f32 to vector<16x128xf32>
    %266 = arith.maximumf %264, %265 : vector<16x128xf32>
    %267 = arith.addf %261, %266 : vector<16x128xf32>
    %268 = vector.extract_strided_slice %160 {offsets = [288, 0], sizes = [16, 128], strides = [1, 1]} : vector<400x128xf32> to vector<16x128xf32>
    %269 = vector.broadcast %158 : vector<1x128xf32> to vector<16x128xf32>
    %270 = arith.addf %268, %269 : vector<16x128xf32>
    %cst_58 = arith.constant 0.000000e+00 : f32
    %271 = vector.broadcast %cst_58 : f32 to vector<16x128xf32>
    %272 = arith.maximumf %270, %271 : vector<16x128xf32>
    %273 = arith.addf %267, %272 : vector<16x128xf32>
    %274 = vector.extract_strided_slice %160 {offsets = [304, 0], sizes = [16, 128], strides = [1, 1]} : vector<400x128xf32> to vector<16x128xf32>
    %275 = vector.broadcast %158 : vector<1x128xf32> to vector<16x128xf32>
    %276 = arith.addf %274, %275 : vector<16x128xf32>
    %cst_59 = arith.constant 0.000000e+00 : f32
    %277 = vector.broadcast %cst_59 : f32 to vector<16x128xf32>
    %278 = arith.maximumf %276, %277 : vector<16x128xf32>
    %279 = arith.addf %273, %278 : vector<16x128xf32>
    %280 = vector.extract_strided_slice %160 {offsets = [320, 0], sizes = [16, 128], strides = [1, 1]} : vector<400x128xf32> to vector<16x128xf32>
    %281 = vector.broadcast %158 : vector<1x128xf32> to vector<16x128xf32>
    %282 = arith.addf %280, %281 : vector<16x128xf32>
    %cst_60 = arith.constant 0.000000e+00 : f32
    %283 = vector.broadcast %cst_60 : f32 to vector<16x128xf32>
    %284 = arith.maximumf %282, %283 : vector<16x128xf32>
    %285 = arith.addf %279, %284 : vector<16x128xf32>
    %286 = vector.extract_strided_slice %160 {offsets = [336, 0], sizes = [16, 128], strides = [1, 1]} : vector<400x128xf32> to vector<16x128xf32>
    %287 = vector.broadcast %158 : vector<1x128xf32> to vector<16x128xf32>
    %288 = arith.addf %286, %287 : vector<16x128xf32>
    %cst_61 = arith.constant 0.000000e+00 : f32
    %289 = vector.broadcast %cst_61 : f32 to vector<16x128xf32>
    %290 = arith.maximumf %288, %289 : vector<16x128xf32>
    %291 = arith.addf %285, %290 : vector<16x128xf32>
    %292 = vector.extract_strided_slice %160 {offsets = [352, 0], sizes = [16, 128], strides = [1, 1]} : vector<400x128xf32> to vector<16x128xf32>
    %293 = vector.broadcast %158 : vector<1x128xf32> to vector<16x128xf32>
    %294 = arith.addf %292, %293 : vector<16x128xf32>
    %cst_62 = arith.constant 0.000000e+00 : f32
    %295 = vector.broadcast %cst_62 : f32 to vector<16x128xf32>
    %296 = arith.maximumf %294, %295 : vector<16x128xf32>
    %297 = arith.addf %291, %296 : vector<16x128xf32>
    %298 = vector.extract_strided_slice %160 {offsets = [368, 0], sizes = [16, 128], strides = [1, 1]} : vector<400x128xf32> to vector<16x128xf32>
    %299 = vector.broadcast %158 : vector<1x128xf32> to vector<16x128xf32>
    %300 = arith.addf %298, %299 : vector<16x128xf32>
    %cst_63 = arith.constant 0.000000e+00 : f32
    %301 = vector.broadcast %cst_63 : f32 to vector<16x128xf32>
    %302 = arith.maximumf %300, %301 : vector<16x128xf32>
    %303 = arith.addf %297, %302 : vector<16x128xf32>
    %304 = vector.extract_strided_slice %160 {offsets = [384, 0], sizes = [16, 128], strides = [1, 1]} : vector<400x128xf32> to vector<16x128xf32>
    %305 = vector.broadcast %158 : vector<1x128xf32> to vector<16x128xf32>
    %306 = arith.addf %304, %305 : vector<16x128xf32>
    %cst_64 = arith.constant 0.000000e+00 : f32
    %307 = vector.broadcast %cst_64 : f32 to vector<16x128xf32>
    %308 = arith.maximumf %306, %307 : vector<16x128xf32>
    %309 = arith.addf %303, %308 : vector<16x128xf32>
    %cst_65 = arith.constant 4.000000e-02 : f32
    %310 = vector.broadcast %cst_65 : f32 to vector<16x128xf32>
    %311 = arith.mulf %309, %310 : vector<16x128xf32>
    %312 = vector.extract_strided_slice %2 {offsets = [0, 0], sizes = [16, 64], strides = [1, 1]} : vector<400x64xbf16> to vector<16x64xbf16>
    %313 = arith.extf %312 : vector<16x64xbf16> to vector<16x64xf32>
    %314 = vector.extract_strided_slice %2 {offsets = [16, 0], sizes = [16, 64], strides = [1, 1]} : vector<400x64xbf16> to vector<16x64xbf16>
    %315 = arith.extf %314 : vector<16x64xbf16> to vector<16x64xf32>
    %316 = arith.addf %313, %315 : vector<16x64xf32>
    %317 = vector.extract_strided_slice %2 {offsets = [32, 0], sizes = [16, 64], strides = [1, 1]} : vector<400x64xbf16> to vector<16x64xbf16>
    %318 = arith.extf %317 : vector<16x64xbf16> to vector<16x64xf32>
    %319 = arith.addf %316, %318 : vector<16x64xf32>
    %320 = vector.extract_strided_slice %2 {offsets = [48, 0], sizes = [16, 64], strides = [1, 1]} : vector<400x64xbf16> to vector<16x64xbf16>
    %321 = arith.extf %320 : vector<16x64xbf16> to vector<16x64xf32>
    %322 = arith.addf %319, %321 : vector<16x64xf32>
    %323 = vector.extract_strided_slice %2 {offsets = [64, 0], sizes = [16, 64], strides = [1, 1]} : vector<400x64xbf16> to vector<16x64xbf16>
    %324 = arith.extf %323 : vector<16x64xbf16> to vector<16x64xf32>
    %325 = arith.addf %322, %324 : vector<16x64xf32>
    %326 = vector.extract_strided_slice %2 {offsets = [80, 0], sizes = [16, 64], strides = [1, 1]} : vector<400x64xbf16> to vector<16x64xbf16>
    %327 = arith.extf %326 : vector<16x64xbf16> to vector<16x64xf32>
    %328 = arith.addf %325, %327 : vector<16x64xf32>
    %329 = vector.extract_strided_slice %2 {offsets = [96, 0], sizes = [16, 64], strides = [1, 1]} : vector<400x64xbf16> to vector<16x64xbf16>
    %330 = arith.extf %329 : vector<16x64xbf16> to vector<16x64xf32>
    %331 = arith.addf %328, %330 : vector<16x64xf32>
    %332 = vector.extract_strided_slice %2 {offsets = [112, 0], sizes = [16, 64], strides = [1, 1]} : vector<400x64xbf16> to vector<16x64xbf16>
    %333 = arith.extf %332 : vector<16x64xbf16> to vector<16x64xf32>
    %334 = arith.addf %331, %333 : vector<16x64xf32>
    %335 = vector.extract_strided_slice %2 {offsets = [128, 0], sizes = [16, 64], strides = [1, 1]} : vector<400x64xbf16> to vector<16x64xbf16>
    %336 = arith.extf %335 : vector<16x64xbf16> to vector<16x64xf32>
    %337 = arith.addf %334, %336 : vector<16x64xf32>
    %338 = vector.extract_strided_slice %2 {offsets = [144, 0], sizes = [16, 64], strides = [1, 1]} : vector<400x64xbf16> to vector<16x64xbf16>
    %339 = arith.extf %338 : vector<16x64xbf16> to vector<16x64xf32>
    %340 = arith.addf %337, %339 : vector<16x64xf32>
    %341 = vector.extract_strided_slice %2 {offsets = [160, 0], sizes = [16, 64], strides = [1, 1]} : vector<400x64xbf16> to vector<16x64xbf16>
    %342 = arith.extf %341 : vector<16x64xbf16> to vector<16x64xf32>
    %343 = arith.addf %340, %342 : vector<16x64xf32>
    %344 = vector.extract_strided_slice %2 {offsets = [176, 0], sizes = [16, 64], strides = [1, 1]} : vector<400x64xbf16> to vector<16x64xbf16>
    %345 = arith.extf %344 : vector<16x64xbf16> to vector<16x64xf32>
    %346 = arith.addf %343, %345 : vector<16x64xf32>
    %347 = vector.extract_strided_slice %2 {offsets = [192, 0], sizes = [16, 64], strides = [1, 1]} : vector<400x64xbf16> to vector<16x64xbf16>
    %348 = arith.extf %347 : vector<16x64xbf16> to vector<16x64xf32>
    %349 = arith.addf %346, %348 : vector<16x64xf32>
    %350 = vector.extract_strided_slice %2 {offsets = [208, 0], sizes = [16, 64], strides = [1, 1]} : vector<400x64xbf16> to vector<16x64xbf16>
    %351 = arith.extf %350 : vector<16x64xbf16> to vector<16x64xf32>
    %352 = arith.addf %349, %351 : vector<16x64xf32>
    %353 = vector.extract_strided_slice %2 {offsets = [224, 0], sizes = [16, 64], strides = [1, 1]} : vector<400x64xbf16> to vector<16x64xbf16>
    %354 = arith.extf %353 : vector<16x64xbf16> to vector<16x64xf32>
    %355 = arith.addf %352, %354 : vector<16x64xf32>
    %356 = vector.extract_strided_slice %2 {offsets = [240, 0], sizes = [16, 64], strides = [1, 1]} : vector<400x64xbf16> to vector<16x64xbf16>
    %357 = arith.extf %356 : vector<16x64xbf16> to vector<16x64xf32>
    %358 = arith.addf %355, %357 : vector<16x64xf32>
    %359 = vector.extract_strided_slice %2 {offsets = [256, 0], sizes = [16, 64], strides = [1, 1]} : vector<400x64xbf16> to vector<16x64xbf16>
    %360 = arith.extf %359 : vector<16x64xbf16> to vector<16x64xf32>
    %361 = arith.addf %358, %360 : vector<16x64xf32>
    %362 = vector.extract_strided_slice %2 {offsets = [272, 0], sizes = [16, 64], strides = [1, 1]} : vector<400x64xbf16> to vector<16x64xbf16>
    %363 = arith.extf %362 : vector<16x64xbf16> to vector<16x64xf32>
    %364 = arith.addf %361, %363 : vector<16x64xf32>
    %365 = vector.extract_strided_slice %2 {offsets = [288, 0], sizes = [16, 64], strides = [1, 1]} : vector<400x64xbf16> to vector<16x64xbf16>
    %366 = arith.extf %365 : vector<16x64xbf16> to vector<16x64xf32>
    %367 = arith.addf %364, %366 : vector<16x64xf32>
    %368 = vector.extract_strided_slice %2 {offsets = [304, 0], sizes = [16, 64], strides = [1, 1]} : vector<400x64xbf16> to vector<16x64xbf16>
    %369 = arith.extf %368 : vector<16x64xbf16> to vector<16x64xf32>
    %370 = arith.addf %367, %369 : vector<16x64xf32>
    %371 = vector.extract_strided_slice %2 {offsets = [320, 0], sizes = [16, 64], strides = [1, 1]} : vector<400x64xbf16> to vector<16x64xbf16>
    %372 = arith.extf %371 : vector<16x64xbf16> to vector<16x64xf32>
    %373 = arith.addf %370, %372 : vector<16x64xf32>
    %374 = vector.extract_strided_slice %2 {offsets = [336, 0], sizes = [16, 64], strides = [1, 1]} : vector<400x64xbf16> to vector<16x64xbf16>
    %375 = arith.extf %374 : vector<16x64xbf16> to vector<16x64xf32>
    %376 = arith.addf %373, %375 : vector<16x64xf32>
    %377 = vector.extract_strided_slice %2 {offsets = [352, 0], sizes = [16, 64], strides = [1, 1]} : vector<400x64xbf16> to vector<16x64xbf16>
    %378 = arith.extf %377 : vector<16x64xbf16> to vector<16x64xf32>
    %379 = arith.addf %376, %378 : vector<16x64xf32>
    %380 = vector.extract_strided_slice %2 {offsets = [368, 0], sizes = [16, 64], strides = [1, 1]} : vector<400x64xbf16> to vector<16x64xbf16>
    %381 = arith.extf %380 : vector<16x64xbf16> to vector<16x64xf32>
    %382 = arith.addf %379, %381 : vector<16x64xf32>
    %383 = vector.extract_strided_slice %2 {offsets = [384, 0], sizes = [16, 64], strides = [1, 1]} : vector<400x64xbf16> to vector<16x64xbf16>
    %384 = arith.extf %383 : vector<16x64xbf16> to vector<16x64xf32>
    %385 = arith.addf %382, %384 : vector<16x64xf32>
    %cst_66 = arith.constant 4.000000e-02 : f32
    %386 = vector.broadcast %cst_66 : f32 to vector<16x64xf32>
    %387 = arith.mulf %385, %386 : vector<16x64xf32>
    %388 = arith.truncf %387 : vector<16x64xf32> to vector<16x64xbf16>
    %c0_67 = arith.constant 0 : index
    %c0_68 = arith.constant 0 : index
    %389 = vector.load %arg4[%c0_67, %c0_68] : memref<64x128xbf16, #tpu.memory_space<vmem>>, vector<64x128xbf16>
    %cst_69 = arith.constant dense<0.000000e+00> : vector<16x128xf32>
    %390 = tpu.matmul %388, %389, %cst_69 {dimension_numbers = #tpu.dot_dimension_numbers<[1], [0], [0], [1], [0, 0, 1, 1], [], []>} : vector<16x64xbf16>, vector<64x128xbf16>, vector<16x128xf32> -> vector<16x128xf32>
    %391 = vector.broadcast %158 : vector<1x128xf32> to vector<16x128xf32>
    %392 = arith.addf %390, %391 : vector<16x128xf32>
    %cst_70 = arith.constant 0.000000e+00 : f32
    %393 = vector.broadcast %cst_70 : f32 to vector<16x128xf32>
    %394 = arith.maximumf %392, %393 : vector<16x128xf32>
    %c0_71 = arith.constant 0 : index
    %c0_72 = arith.constant 0 : index
    %395 = vector.load %arg8[%c0_71, %c0_72] : memref<1x128xf32, #tpu.memory_space<vmem>>, vector<1x128xf32>
    %396 = arith.truncf %394 : vector<16x128xf32> to vector<16x128xbf16>
    %c0_73 = arith.constant 0 : index
    %c0_74 = arith.constant 0 : index
    %397 = vector.load %arg7[%c0_73, %c0_74] : memref<128x128xbf16, #tpu.memory_space<vmem>>, vector<128x128xbf16>
    %cst_75 = arith.constant dense<0.000000e+00> : vector<16x128xf32>
    %398 = tpu.matmul %396, %397, %cst_75 {dimension_numbers = #tpu.dot_dimension_numbers<[1], [0], [0], [1], [0, 0, 1, 1], [], []>} : vector<16x128xbf16>, vector<128x128xbf16>, vector<16x128xf32> -> vector<16x128xf32>
    %399 = vector.broadcast %395 : vector<1x128xf32> to vector<16x128xf32>
    %400 = arith.addf %399, %398 : vector<16x128xf32>
    %401 = arith.truncf %157 : vector<16x128xf32> to vector<16x128xbf16>
    %c0_76 = arith.constant 0 : index
    %c0_77 = arith.constant 0 : index
    %402 = vector.load %arg9[%c0_76, %c0_77] : memref<128x128xbf16, #tpu.memory_space<vmem>>, vector<128x128xbf16>
    %cst_78 = arith.constant dense<0.000000e+00> : vector<16x128xf32>
    %403 = tpu.matmul %401, %402, %cst_78 {dimension_numbers = #tpu.dot_dimension_numbers<[1], [0], [0], [1], [0, 0, 1, 1], [], []>} : vector<16x128xbf16>, vector<128x128xbf16>, vector<16x128xf32> -> vector<16x128xf32>
    %404 = arith.truncf %311 : vector<16x128xf32> to vector<16x128xbf16>
    %c0_79 = arith.constant 0 : index
    %c0_80 = arith.constant 0 : index
    %405 = vector.load %arg10[%c0_79, %c0_80] : memref<128x128xbf16, #tpu.memory_space<vmem>>, vector<128x128xbf16>
    %cst_81 = arith.constant dense<0.000000e+00> : vector<16x128xf32>
    %406 = tpu.matmul %404, %405, %cst_81 {dimension_numbers = #tpu.dot_dimension_numbers<[1], [0], [0], [1], [0, 0, 1, 1], [], []>} : vector<16x128xbf16>, vector<128x128xbf16>, vector<16x128xf32> -> vector<16x128xf32>
    %407 = arith.addf %403, %406 : vector<16x128xf32>
    %408 = arith.mulf %400, %400 : vector<16x128xf32>
    %cst_82 = arith.constant dense<0.000000e+00> : vector<16xf32>
    %409 = vector.multi_reduction <add>, %408, %cst_82 [1] : vector<16x128xf32> to vector<16xf32>
    %410 = vector.shape_cast %409 : vector<16xf32> to vector<16x1xf32>
    %411 = arith.mulf %407, %407 : vector<16x128xf32>
    %cst_83 = arith.constant dense<0.000000e+00> : vector<16xf32>
    %412 = vector.multi_reduction <add>, %411, %cst_83 [1] : vector<16x128xf32> to vector<16xf32>
    %413 = vector.shape_cast %412 : vector<16xf32> to vector<16x1xf32>
    %414 = arith.addf %410, %413 : vector<16x1xf32>
    %cst_84 = arith.constant 1.000000e-24 : f32
    %415 = vector.broadcast %cst_84 : f32 to vector<16x1xf32>
    %416 = arith.maximumf %414, %415 : vector<16x1xf32>
    %417 = math.rsqrt %416 : vector<16x1xf32>
    %c0_85 = arith.constant 0 : index
    %c0_86 = arith.constant 0 : index
    %418 = vector.load %arg11[%c0_85, %c0_86] : memref<1x128xf32, #tpu.memory_space<vmem>>, vector<1x128xf32>
    %419 = vector.broadcast %418 : vector<1x128xf32> to vector<16x128xf32>
    %420 = arith.mulf %400, %419 : vector<16x128xf32>
    %cst_87 = arith.constant dense<0.000000e+00> : vector<16xf32>
    %421 = vector.multi_reduction <add>, %420, %cst_87 [1] : vector<16x128xf32> to vector<16xf32>
    %422 = vector.shape_cast %421 : vector<16xf32> to vector<16x1xf32>
    %c0_88 = arith.constant 0 : index
    %c0_89 = arith.constant 0 : index
    %423 = vector.load %arg12[%c0_88, %c0_89] : memref<1x128xf32, #tpu.memory_space<vmem>>, vector<1x128xf32>
    %424 = vector.broadcast %423 : vector<1x128xf32> to vector<16x128xf32>
    %425 = arith.mulf %407, %424 : vector<16x128xf32>
    %cst_90 = arith.constant dense<0.000000e+00> : vector<16xf32>
    %426 = vector.multi_reduction <add>, %425, %cst_90 [1] : vector<16x128xf32> to vector<16xf32>
    %427 = vector.shape_cast %426 : vector<16xf32> to vector<16x1xf32>
    %428 = arith.addf %422, %427 : vector<16x1xf32>
    %429 = arith.mulf %428, %417 : vector<16x1xf32>
    %c0_91 = arith.constant 0 : index
    %c0_92 = arith.constant 0 : index
    %430 = vector.load %arg13[%c0_91, %c0_92] : memref<1x1xf32, #tpu.memory_space<vmem>>, vector<1x1xf32>
    %431 = vector.broadcast %430 : vector<1x1xf32> to vector<16x1xf32>
    %432 = arith.addf %429, %431 : vector<16x1xf32>
    %c0_93 = arith.constant 0 : index
    %c0_94 = arith.constant 0 : index
    %433 = vector.load %arg14[%c0_93, %c0_94] : memref<16x1xf32, #tpu.memory_space<vmem>>, vector<16x1xf32>
    tpu.vector_store %arg14[%c0_93, %c0_94], %432 {strides = array<i32>} : memref<16x1xf32, #tpu.memory_space<vmem>>, vector<16x1xf32>,
    return
  }
  func.func @transform_0(%arg0: i32) -> (i32, i32, i32) {
    %c0_i32 = arith.constant 0 : i32
    %c0_i32_0 = arith.constant 0 : i32
    %c0_i32_1 = arith.constant 0 : i32
    return %c0_i32, %arg0, %c0_i32_0 : i32, i32, i32
  }
  func.func @transform_1(%arg0: i32) -> (i32, i32, i32) {
    %c0_i32 = arith.constant 0 : i32
    %c0_i32_0 = arith.constant 0 : i32
    %c0_i32_1 = arith.constant 0 : i32
    return %c0_i32, %arg0, %c0_i32_0 : i32, i32, i32
  }
  func.func @transform_2(%arg0: i32) -> (i32, i32) {
    %c0_i32 = arith.constant 0 : i32
    %c0_i32_0 = arith.constant 0 : i32
    %c0_i32_1 = arith.constant 0 : i32
    return %c0_i32, %c0_i32_0 : i32, i32
  }
  func.func @transform_3(%arg0: i32) -> (i32, i32) {
    %c0_i32 = arith.constant 0 : i32
    %c0_i32_0 = arith.constant 0 : i32
    %c0_i32_1 = arith.constant 0 : i32
    return %c0_i32, %c0_i32_0 : i32, i32
  }
  func.func @transform_4(%arg0: i32) -> (i32, i32) {
    %c0_i32 = arith.constant 0 : i32
    %c0_i32_0 = arith.constant 0 : i32
    %c0_i32_1 = arith.constant 0 : i32
    return %c0_i32, %c0_i32_0 : i32, i32
  }
  func.func @transform_5(%arg0: i32) -> (i32, i32) {
    %c0_i32 = arith.constant 0 : i32
    %c0_i32_0 = arith.constant 0 : i32
    %c0_i32_1 = arith.constant 0 : i32
    return %c0_i32, %c0_i32_0 : i32, i32
  }
  func.func @transform_6(%arg0: i32) -> (i32, i32) {
    %c0_i32 = arith.constant 0 : i32
    %c0_i32_0 = arith.constant 0 : i32
    %c0_i32_1 = arith.constant 0 : i32
    return %c0_i32, %c0_i32_0 : i32, i32
  }
  func.func @transform_7(%arg0: i32) -> (i32, i32) {
    %c0_i32 = arith.constant 0 : i32
    %c0_i32_0 = arith.constant 0 : i32
    %c0_i32_1 = arith.constant 0 : i32
    return %c0_i32, %c0_i32_0 : i32, i32
  }
  func.func @transform_8(%arg0: i32) -> (i32, i32) {
    %c0_i32 = arith.constant 0 : i32
    %c0_i32_0 = arith.constant 0 : i32
    %c0_i32_1 = arith.constant 0 : i32
    return %c0_i32, %c0_i32_0 : i32, i32
  }
  func.func @transform_9(%arg0: i32) -> (i32, i32) {
    %c0_i32 = arith.constant 0 : i32
    %c0_i32_0 = arith.constant 0 : i32
    %c0_i32_1 = arith.constant 0 : i32
    return %c0_i32, %c0_i32_0 : i32, i32
  }
  func.func @transform_10(%arg0: i32) -> (i32, i32) {
    %c0_i32 = arith.constant 0 : i32
    %c0_i32_0 = arith.constant 0 : i32
    %c0_i32_1 = arith.constant 0 : i32
    return %c0_i32, %c0_i32_0 : i32, i32
  }
  func.func @transform_11(%arg0: i32) -> (i32, i32) {
    %c0_i32 = arith.constant 0 : i32
    %c0_i32_0 = arith.constant 0 : i32
    %c0_i32_1 = arith.constant 0 : i32
    return %c0_i32, %c0_i32_0 : i32, i32
  }
  func.func @transform_12(%arg0: i32) -> (i32, i32) {
    %c0_i32 = arith.constant 0 : i32
    %c0_i32_0 = arith.constant 0 : i32
    %c0_i32_1 = arith.constant 0 : i32
    return %c0_i32, %c0_i32_0 : i32, i32
  }
  func.func @transform_13(%arg0: i32) -> (i32, i32) {
    %c0_i32 = arith.constant 0 : i32
    %c0_i32_0 = arith.constant 0 : i32
    return %arg0, %c0_i32 : i32, i32
  }
}

</mosaic_0001>

<llo_original>
// kernel: tpu_custom_call.1
$region0: #{tpu_custom_call.1}
  #allocation0 [shape = 'u32[]', space=smem, size = 0x4, offset = 0x4, fixed_abs, tag = 'smem constant byte address 0x4 - core index']
  #allocation1 [shape = 'u32[144,128]{1,0:T(1,128)}', space=vmem, size = 0x12000, scoped, tag = 'internal scratch']
  #allocation2 [shape = 'f32[1,1]{1,0:T(1,128)S(1)}', space=vmem, size = 0x200, scoped, tag = 'scoped memory for tpu_custom_call.1']
  %s0 = inlined_call_operand.hbm [shape: bf16[25,16,64], index: 0, kind: input, shape index: {}]
  %s1 = inlined_call_operand.hbm [shape: bf16[25,16,64], index: 1, kind: input, shape index: {}]
  %s2 = inlined_call_operand.hbm [shape: bf16[64,128], index: 2, kind: input, shape index: {}]
  %s3 = inlined_call_operand.hbm [shape: bf16[64,128], index: 3, kind: input, shape index: {}]
  %s4 = inlined_call_operand.vmem [shape: f32[1,128], index: 4, kind: input, shape index: {}]
  %s5 = inlined_call_operand.vmem [shape: f32[1,128], index: 5, kind: input, shape index: {}]
  %s6 = inlined_call_operand.hbm [shape: bf16[128,128], index: 6, kind: input, shape index: {}]
  %s7 = inlined_call_operand.vmem [shape: f32[1,128], index: 7, kind: input, shape index: {}]
  %s8 = inlined_call_operand.hbm [shape: bf16[128,128], index: 8, kind: input, shape index: {}]
  %s9 = inlined_call_operand.hbm [shape: bf16[128,128], index: 9, kind: input, shape index: {}]
  %s10 = inlined_call_operand.vmem [shape: f32[1,128], index: 10, kind: input, shape index: {}]
  %s11 = inlined_call_operand.vmem [shape: f32[1,128], index: 11, kind: input, shape index: {}]
  %s12 = inlined_call_operand.<no memory space> [shape: f32[1,1], index: 12, kind: input, shape index: {}]
  %s13 = inlined_call_operand.vmem [shape: f32[16,1], index: 13, kind: output, shape index: {}]
  %s14 = sld [smem:[#allocation0]]
  $region90: #{tpu_custom_call.1} parent=0
    _
  %s16 = ssub.s32 1, %s14
  %s17 = scalar_select 0, %s16, %s14
  %v18 = vstv %s12
  %19 = vst [vmem:[#allocation2] sm:$0x1] %v18
  $region1: #{tpu_custom_call.1} parent=0
    #allocation3 [shape = 'u8[102400]{0}', space=vmem, size = 0x19000, scoped, tag = 'input window, operand 0, single buffered']
    #allocation4 [shape = 's32[1]{0}', space=sflag, size = 0x4, scoped, tag = 'scoped memory for tpu_custom_call.1']
    #allocation5 [shape = 'u8[102400]{0}', space=vmem, size = 0x19000, scoped, tag = 'input window, operand 1, single buffered']
    #allocation6 [shape = 's32[1]{0}', space=sflag, size = 0x4, scoped, tag = 'scoped memory for tpu_custom_call.1']
    #allocation7 [shape = 'u8[16384]{0}', space=vmem, size = 0x4000, scoped, tag = 'input window, operand 2, single buffered']
    #allocation8 [shape = 'u8[16384]{0}', space=vmem, size = 0x4000, scoped, tag = 'input window, operand 3, single buffered']
    #allocation9 [shape = 's32[1]{0}', space=sflag, size = 0x4, scoped, tag = 'scoped memory for tpu_custom_call.1']
    #allocation10 [shape = 'u8[32768]{0}', space=vmem, size = 0x8000, scoped, tag = 'input window, operand 6, single buffered']
    #allocation11 [shape = 'u8[32768]{0}', space=vmem, size = 0x8000, scoped, tag = 'input window, operand 8, single buffered']
    #allocation12 [shape = 's32[1]{0}', space=sflag, size = 0x4, scoped, tag = 'scoped memory for tpu_custom_call.1']
    #allocation13 [shape = 'u8[32768]{0}', space=vmem, size = 0x8000, scoped, tag = 'input window, operand 9, single buffered']
    %20 = vsyncpa [#allocation4], 0
    %21 = vsyncpa [#allocation6], 0
    %22 = vsyncpa [#allocation9], 0
    %23 = vsyncpa [#allocation12], 0
    // Predicated region
    $region2: #{tpu_custom_call.1} parent=1 // pred_check
      _
    $region3: #{tpu_custom_call.1} parent=1 // pred_check_branch
      %25 = sbr.rel (0) target = $region5
    $region4: #{tpu_custom_call.1} parent=1 // pred_region
      %s27 = ssub.s32 3200, 3200
      %28 = vsyncadd [#allocation4], %s27
      %s29 = sshll.u32 [#allocation3], 4
      %s30 = int_to_ptr.vmem [resolvable:$true] %s29
      %35 = dma.hbm_to_vmem [thread:$0]  %s0, 3200, %s30, [#allocation4], 64, 64, 4
    $region5: #{tpu_custom_call.1} parent=1 // pred_fallthru
      _
    // Predicated region
    $region6: #{tpu_custom_call.1} parent=1 // pred_check
      _
    $region7: #{tpu_custom_call.1} parent=1 // pred_check_branch
      %37 = sbr.rel (0) target = $region9
    $region8: #{tpu_custom_call.1} parent=1 // pred_region
      %s39 = ssub.s32 3200, 3200
      %40 = vsyncadd [#allocation6], %s39
      %s41 = sshll.u32 [#allocation5], 4
      %s42 = int_to_ptr.vmem [resolvable:$true] %s41
      %47 = dma.hbm_to_vmem [thread:$0]  %s1, 3200, %s42, [#allocation6], 64, 64, 4
    $region9: #{tpu_custom_call.1} parent=1 // pred_fallthru
      _
    // Predicated region
    $region10: #{tpu_custom_call.1} parent=1 // pred_check
      _
    $region11: #{tpu_custom_call.1} parent=1 // pred_check_branch
      %49 = sbr.rel (0) target = $region13
    $region12: #{tpu_custom_call.1} parent=1 // pred_region
      %s51 = ssub.s32 512, 512
      %52 = vsyncadd [#allocation6], %s51
      %s53 = sshll.u32 [#allocation7], 4
      %s54 = int_to_ptr.vmem [resolvable:$true] %s53
      %59 = dma.hbm_to_vmem [thread:$0]  %s2, 512, %s54, [#allocation6], 64, 64, 4
    $region13: #{tpu_custom_call.1} parent=1 // pred_fallthru
      _
    // Predicated region
    $region14: #{tpu_custom_call.1} parent=1 // pred_check
      _
    $region15: #{tpu_custom_call.1} parent=1 // pred_check_branch
      %61 = sbr.rel (0) target = $region17
    $region16: #{tpu_custom_call.1} parent=1 // pred_region
      %s63 = ssub.s32 512, 512
      %64 = vsyncadd [#allocation9], %s63
      %s65 = sshll.u32 [#allocation8], 4
      %s66 = int_to_ptr.vmem [resolvable:$true] %s65
      %71 = dma.hbm_to_vmem [thread:$0]  %s3, 512, %s66, [#allocation9], 64, 64, 4
    $region17: #{tpu_custom_call.1} parent=1 // pred_fallthru
      _
    // Predicated region
    $region18: #{tpu_custom_call.1} parent=1 // pred_check
      _
    $region19: #{tpu_custom_call.1} parent=1 // pred_check_branch
      %73 = sbr.rel (0) target = $region21
    $region20: #{tpu_custom_call.1} parent=1 // pred_region
      _
    $region21: #{tpu_custom_call.1} parent=1 // pred_fallthru
      _
    // Predicated region
    $region22: #{tpu_custom_call.1} parent=1 // pred_check
      _
    $region23: #{tpu_custom_call.1} parent=1 // pred_check_branch
      %75 = sbr.rel (0) target = $region25
    $region24: #{tpu_custom_call.1} parent=1 // pred_region
      _
    $region25: #{tpu_custom_call.1} parent=1 // pred_fallthru
      _
    // Predicated region
    $region26: #{tpu_custom_call.1} parent=1 // pred_check
      _
    $region27: #{tpu_custom_call.1} parent=1 // pred_check_branch
      %77 = sbr.rel (0) target = $region29
    $region28: #{tpu_custom_call.1} parent=1 // pred_region
      %s79 = ssub.s32 1024, 1024
      %80 = vsyncadd [#allocation9], %s79
      %s81 = sshll.u32 [#allocation10], 4
      %s82 = int_to_ptr.vmem [resolvable:$true] %s81
      %87 = dma.hbm_to_vmem [thread:$0]  %s6, 1024, %s82, [#allocation9], 64, 64, 4
    $region29: #{tpu_custom_call.1} parent=1 // pred_fallthru
      _
    // Predicated region
    $region30: #{tpu_custom_call.1} parent=1 // pred_check
      _
    $region31: #{tpu_custom_call.1} parent=1 // pred_check_branch
      %89 = sbr.rel (0) target = $region33
    $region32: #{tpu_custom_call.1} parent=1 // pred_region
      _
    $region33: #{tpu_custom_call.1} parent=1 // pred_fallthru
      _
    // Predicated region
    $region34: #{tpu_custom_call.1} parent=1 // pred_check
      _
    $region35: #{tpu_custom_call.1} parent=1 // pred_check_branch
      %91 = sbr.rel (0) target = $region37
    $region36: #{tpu_custom_call.1} parent=1 // pred_region
      %s93 = ssub.s32 1024, 1024
      %94 = vsyncadd [#allocation12], %s93
      %s95 = sshll.u32 [#allocation11], 4
      %s96 = int_to_ptr.vmem [resolvable:$true] %s95
      %101 = dma.hbm_to_vmem [thread:$0]  %s8, 1024, %s96, [#allocation12], 64, 64, 4
    $region37: #{tpu_custom_call.1} parent=1 // pred_fallthru
      _
    // Predicated region
    $region38: #{tpu_custom_call.1} parent=1 // pred_check
      _
    $region39: #{tpu_custom_call.1} parent=1 // pred_check_branch
      %103 = sbr.rel (0) target = $region41
    $region40: #{tpu_custom_call.1} parent=1 // pred_region
      %s105 = ssub.s32 1024, 1024
      %106 = vsyncadd [#allocation12], %s105
      %s107 = sshll.u32 [#allocation13], 4
      %s108 = int_to_ptr.vmem [resolvable:$true] %s107
      %113 = dma.hbm_to_vmem [thread:$0]  %s9, 1024, %s108, [#allocation12], 64, 64, 4
    $region41: #{tpu_custom_call.1} parent=1 // pred_fallthru
      _
    // Predicated region
    $region42: #{tpu_custom_call.1} parent=1 // pred_check
      _
    $region43: #{tpu_custom_call.1} parent=1 // pred_check_branch
      %115 = sbr.rel (0) target = $region45
    $region44: #{tpu_custom_call.1} parent=1 // pred_region
      _
    $region45: #{tpu_custom_call.1} parent=1 // pred_fallthru
      _
    // Predicated region
    $region46: #{tpu_custom_call.1} parent=1 // pred_check
      _
    $region47: #{tpu_custom_call.1} parent=1 // pred_check_branch
      %117 = sbr.rel (0) target = $region49
    $region48: #{tpu_custom_call.1} parent=1 // pred_region
      _
    $region49: #{tpu_custom_call.1} parent=1 // pred_fallthru
      _
    // Predicated region
    $region50: #{tpu_custom_call.1} parent=1 // pred_check
      _
    $region51: #{tpu_custom_call.1} parent=1 // pred_check_branch
      %119 = sbr.rel (0) target = $region53
    $region52: #{tpu_custom_call.1} parent=1 // pred_region
      _
    $region53: #{tpu_custom_call.1} parent=1 // pred_fallthru
      _
    // Predicated region
    $region54: #{tpu_custom_call.1} parent=1 // pred_check
      _
    $region55: #{tpu_custom_call.1} parent=1 // pred_check_branch
      %121 = sbr.rel (0) target = $region57
    $region56: #{tpu_custom_call.1} parent=1 // pred_region
      %122 = dma.done [#allocation4], 3200
    $region57: #{tpu_custom_call.1} parent=1 // pred_fallthru
      _
    // Predicated region
    $region58: #{tpu_custom_call.1} parent=1 // pred_check
      _
    $region59: #{tpu_custom_call.1} parent=1 // pred_check_branch
      %124 = sbr.rel (0) target = $region61
    $region60: #{tpu_custom_call.1} parent=1 // pred_region
      %125 = dma.done [#allocation6], 3200
    $region61: #{tpu_custom_call.1} parent=1 // pred_fallthru
      _
    // Predicated region
    $region62: #{tpu_custom_call.1} parent=1 // pred_check
      _
    $region63: #{tpu_custom_call.1} parent=1 // pred_check_branch
      %127 = sbr.rel (0) target = $region65
    $region64: #{tpu_custom_call.1} parent=1 // pred_region
      %128 = dma.done [#allocation6], 512
    $region65: #{tpu_custom_call.1} parent=1 // pred_fallthru
      _
    // Predicated region
    $region66: #{tpu_custom_call.1} parent=1 // pred_check
      _
    $region67: #{tpu_custom_call.1} parent=1 // pred_check_branch
      %130 = sbr.rel (0) target = $region69
    $region68: #{tpu_custom_call.1} parent=1 // pred_region
      %131 = dma.done [#allocation9], 512
    $region69: #{tpu_custom_call.1} parent=1 // pred_fallthru
      _
    // Predicated region
    $region70: #{tpu_custom_call.1} parent=1 // pred_check
      _
    $region71: #{tpu_custom_call.1} parent=1 // pred_check_branch
      %133 = sbr.rel (0) target = $region73
    $region72: #{tpu_custom_call.1} parent=1 // pred_region
      %134 = dma.done [#allocation9], 1024
    $region73: #{tpu_custom_call.1} parent=1 // pred_fallthru
      _
    // Predicated region
    $region74: #{tpu_custom_call.1} parent=1 // pred_check
      _
    $region75: #{tpu_custom_call.1} parent=1 // pred_check_branch
      %136 = sbr.rel (0) target = $region77
    $region76: #{tpu_custom_call.1} parent=1 // pred_region
      %137 = dma.done [#allocation12], 1024
    $region77: #{tpu_custom_call.1} parent=1 // pred_fallthru
      _
    // Predicated region
    $region78: #{tpu_custom_call.1} parent=1 // pred_check
      _
    $region79: #{tpu_custom_call.1} parent=1 // pred_check_branch
      %139 = sbr.rel (0) target = $region81
    $region80: #{tpu_custom_call.1} parent=1 // pred_region
      %140 = dma.done [#allocation12], 1024
    $region81: #{tpu_custom_call.1} parent=1 // pred_fallthru
      _
    %v142 = vld [vmem:[#allocation3] sm:$0xf]
    %v143 = vld [vmem:[#allocation3 + $0x4] sm:$0xf]
    %v144 = vld [vmem:[#allocation3 + $0x8] sm:$0xf]
    %v145 = vld [vmem:[#allocation3 + $0xc] sm:$0xf]
    %v146 = vld [vmem:[#allocation3 + $0x10] sm:$0xf]
    %v147 = vld [vmem:[#allocation3 + $0x14] sm:$0xf]
    %v148 = vld [vmem:[#allocation3 + $0x18] sm:$0xf]
    %v149 = vld [vmem:[#allocation3 + $0x1c] sm:$0xf]
    %v150 = vld [vmem:[#allocation3 + $0x20] sm:$0xf]
    %v151 = vld [vmem:[#allocation3 + $0x24] sm:$0xf]
    %v152 = vld [vmem:[#allocation3 + $0x28] sm:$0xf]
    %v153 = vld [vmem:[#allocation3 + $0x2c] sm:$0xf]
    %v154 = vld [vmem:[#allocation3 + $0x30] sm:$0xf]
    %v155 = vld [vmem:[#allocation3 + $0x34] sm:$0xf]
    %v156 = vld [vmem:[#allocation3 + $0x38] sm:$0xf]
    %v157 = vld [vmem:[#allocation3 + $0x3c] sm:$0xf]
    %v158 = vld [vmem:[#allocation3 + $0x40] sm:$0xf]
    %v159 = vld [vmem:[#allocation3 + $0x44] sm:$0xf]
    %v160 = vld [vmem:[#allocation3 + $0x48] sm:$0xf]
    %v161 = vld [vmem:[#allocation3 + $0x4c] sm:$0xf]
    %v162 = vld [vmem:[#allocation3 + $0x50] sm:$0xf]
    %v163 = vld [vmem:[#allocation3 + $0x54] sm:$0xf]
    %v164 = vld [vmem:[#allocation3 + $0x58] sm:$0xf]
    %v165 = vld [vmem:[#allocation3 + $0x5c] sm:$0xf]
    %v166 = vld [vmem:[#allocation3 + $0x60] sm:$0xf]
    %v167 = vld [vmem:[#allocation3 + $0x64] sm:$0xf]
    %v168 = vld [vmem:[#allocation3 + $0x68] sm:$0xf]
    %v169 = vld [vmem:[#allocation3 + $0x6c] sm:$0xf]
    %v170 = vld [vmem:[#allocation3 + $0x70] sm:$0xf]
    %v171 = vld [vmem:[#allocation3 + $0x74] sm:$0xf]
    %v172 = vld [vmem:[#allocation3 + $0x78] sm:$0xf]
    %v173 = vld [vmem:[#allocation3 + $0x7c] sm:$0xf]
    %v174 = vld [vmem:[#allocation3 + $0x80] sm:$0xf]
    %v175 = vld [vmem:[#allocation3 + $0x84] sm:$0xf]
    %v176 = vld [vmem:[#allocation3 + $0x88] sm:$0xf]
    %v177 = vld [vmem:[#allocation3 + $0x8c] sm:$0xf]
    %v178 = vld [vmem:[#allocation3 + $0x90] sm:$0xf]
    %v179 = vld [vmem:[#allocation3 + $0x94] sm:$0xf]
    %v180 = vld [vmem:[#allocation3 + $0x98] sm:$0xf]
    %v181 = vld [vmem:[#allocation3 + $0x9c] sm:$0xf]
    %v182 = vld [vmem:[#allocation3 + $0xa0] sm:$0xf]
    %v183 = vld [vmem:[#allocation3 + $0xa4] sm:$0xf]
    %v184 = vld [vmem:[#allocation3 + $0xa8] sm:$0xf]
    %v185 = vld [vmem:[#allocation3 + $0xac] sm:$0xf]
    %v186 = vld [vmem:[#allocation3 + $0xb0] sm:$0xf]
    %v187 = vld [vmem:[#allocation3 + $0xb4] sm:$0xf]
    %v188 = vld [vmem:[#allocation3 + $0xb8] sm:$0xf]
    %v189 = vld [vmem:[#allocation3 + $0xbc] sm:$0xf]
    %v190 = vld [vmem:[#allocation3 + $0xc0] sm:$0xf]
    %v191 = vld [vmem:[#allocation3 + $0xc4] sm:$0xf]
    %v192 = vld [vmem:[#allocation5] sm:$0xf]
    %v193 = vld [vmem:[#allocation5 + $0x4] sm:$0xf]
    %v194 = vld [vmem:[#allocation5 + $0x8] sm:$0xf]
    %v195 = vld [vmem:[#allocation5 + $0xc] sm:$0xf]
    %v196 = vld [vmem:[#allocation5 + $0x10] sm:$0xf]
    %v197 = vld [vmem:[#allocation5 + $0x14] sm:$0xf]
    %v198 = vld [vmem:[#allocation5 + $0x18] sm:$0xf]
    %v199 = vld [vmem:[#allocation5 + $0x1c] sm:$0xf]
    %v200 = vld [vmem:[#allocation5 + $0x20] sm:$0xf]
    %v201 = vld [vmem:[#allocation5 + $0x24] sm:$0xf]
    %v202 = vld [vmem:[#allocation5 + $0x28] sm:$0xf]
    %v203 = vld [vmem:[#allocation5 + $0x2c] sm:$0xf]
    %v204 = vld [vmem:[#allocation5 + $0x30] sm:$0xf]
    %v205 = vld [vmem:[#allocation5 + $0x34] sm:$0xf]
    %v206 = vld [vmem:[#allocation5 + $0x38] sm:$0xf]
    %v207 = vld [vmem:[#allocation5 + $0x3c] sm:$0xf]
    %v208 = vld [vmem:[#allocation5 + $0x40] sm:$0xf]
    %v209 = vld [vmem:[#allocation5 + $0x44] sm:$0xf]
    %v210 = vld [vmem:[#allocation5 + $0x48] sm:$0xf]
    %v211 = vld [vmem:[#allocation5 + $0x4c] sm:$0xf]
    %v212 = vld [vmem:[#allocation5 + $0x50] sm:$0xf]
    %v213 = vld [vmem:[#allocation5 + $0x54] sm:$0xf]
    %v214 = vld [vmem:[#allocation5 + $0x58] sm:$0xf]
    %v215 = vld [vmem:[#allocation5 + $0x5c] sm:$0xf]
    %v216 = vld [vmem:[#allocation5 + $0x60] sm:$0xf]
    %v217 = vld [vmem:[#allocation5 + $0x64] sm:$0xf]
    %v218 = vld [vmem:[#allocation5 + $0x68] sm:$0xf]
    %v219 = vld [vmem:[#allocation5 + $0x6c] sm:$0xf]
    %v220 = vld [vmem:[#allocation5 + $0x70] sm:$0xf]
    %v221 = vld [vmem:[#allocation5 + $0x74] sm:$0xf]
    %v222 = vld [vmem:[#allocation5 + $0x78] sm:$0xf]
    %v223 = vld [vmem:[#allocation5 + $0x7c] sm:$0xf]
    %v224 = vld [vmem:[#allocation5 + $0x80] sm:$0xf]
    %v225 = vld [vmem:[#allocation5 + $0x84] sm:$0xf]
    %v226 = vld [vmem:[#allocation5 + $0x88] sm:$0xf]
    %v227 = vld [vmem:[#allocation5 + $0x8c] sm:$0xf]
    %v228 = vld [vmem:[#allocation5 + $0x90] sm:$0xf]
    %v229 = vld [vmem:[#allocation5 + $0x94] sm:$0xf]
    %v230 = vld [vmem:[#allocation5 + $0x98] sm:$0xf]
    %v231 = vld [vmem:[#allocation5 + $0x9c] sm:$0xf]
    %v232 = vld [vmem:[#allocation5 + $0xa0] sm:$0xf]
    %v233 = vld [vmem:[#allocation5 + $0xa4] sm:$0xf]
    %v234 = vld [vmem:[#allocation5 + $0xa8] sm:$0xf]
    %v235 = vld [vmem:[#allocation5 + $0xac] sm:$0xf]
    %v236 = vld [vmem:[#allocation5 + $0xb0] sm:$0xf]
    %v237 = vld [vmem:[#allocation5 + $0xb4] sm:$0xf]
    %v238 = vld [vmem:[#allocation5 + $0xb8] sm:$0xf]
    %v239 = vld [vmem:[#allocation5 + $0xbc] sm:$0xf]
    %v240 = vld [vmem:[#allocation5 + $0xc0] sm:$0xf]
    %v241 = vld [vmem:[#allocation5 + $0xc4] sm:$0xf]
    %v242 = vld [vmem:[%s4] sm:$0x1]
    %v243 = vld [vmem:[#allocation7] sm:$0xf]
    %v244 = vld [vmem:[#allocation7 + $0x4] sm:$0xf]
    %v245 = vld [vmem:[#allocation7 + $0x8] sm:$0xf]
    %v246 = vld [vmem:[#allocation7 + $0xc] sm:$0xf]
    %v247 = vld [vmem:[#allocation7 + $0x10] sm:$0xf]
    %v248 = vld [vmem:[#allocation7 + $0x14] sm:$0xf]
    %v249 = vld [vmem:[#allocation7 + $0x18] sm:$0xf]
    %v250 = vld [vmem:[#allocation7 + $0x1c] sm:$0xf]
    %v301 = vunpack.c.l.b16 %v142
    %v302 = vunpack.c.l.b16 %v143
    %v303 = vunpack.c.l.b16 %v144
    %v304 = vunpack.c.l.b16 %v145
    %v305 = vunpack.c.l.b16 %v146
    %v306 = vunpack.c.l.b16 %v147
    %v307 = vunpack.c.l.b16 %v148
    %v308 = vunpack.c.l.b16 %v149
    %v309 = vunpack.c.l.b16 %v150
    %v310 = vunpack.c.l.b16 %v151
    %v311 = vunpack.c.l.b16 %v152
    %v312 = vunpack.c.l.b16 %v153
    %v313 = vunpack.c.l.b16 %v154
    %v314 = vunpack.c.l.b16 %v155
    %v315 = vunpack.c.l.b16 %v156
    %v316 = vunpack.c.l.b16 %v157
    %v317 = vunpack.c.l.b16 %v158
    %v318 = vunpack.c.l.b16 %v159
    %v319 = vunpack.c.l.b16 %v160
    %v320 = vunpack.c.l.b16 %v161
    %v321 = vunpack.c.l.b16 %v162
    %v322 = vunpack.c.l.b16 %v163
    %v323 = vunpack.c.l.b16 %v164
    %v324 = vunpack.c.l.b16 %v165
    %v325 = vunpack.c.l.b16 %v166
    %v326 = vunpack.c.l.b16 %v167
    %v327 = vunpack.c.l.b16 %v168
    %v328 = vunpack.c.l.b16 %v169
    %v329 = vunpack.c.l.b16 %v170
    %v330 = vunpack.c.l.b16 %v171
    %v331 = vunpack.c.l.b16 %v172
    %v332 = vunpack.c.l.b16 %v173
    %v333 = vunpack.c.l.b16 %v174
    %v334 = vunpack.c.l.b16 %v175
    %v335 = vunpack.c.l.b16 %v176
    %v336 = vunpack.c.l.b16 %v177
    %v337 = vunpack.c.l.b16 %v178
    %v338 = vunpack.c.l.b16 %v179
    %v339 = vunpack.c.l.b16 %v180
    %v340 = vunpack.c.l.b16 %v181
    %v341 = vunpack.c.l.b16 %v182
    %v342 = vunpack.c.l.b16 %v183
    %v343 = vunpack.c.l.b16 %v184
    %v344 = vunpack.c.l.b16 %v185
    %v345 = vunpack.c.l.b16 %v186
    %v346 = vunpack.c.l.b16 %v187
    %v347 = vunpack.c.l.b16 %v188
    %v348 = vunpack.c.l.b16 %v189
    %v349 = vunpack.c.l.b16 %v190
    %v350 = vunpack.c.l.b16 %v191
    %v351 = vpack.c.b16 %v302, %v301
    %v352 = vpack.c.b16 %v304, %v303
    %v353 = vpack.c.b16 %v306, %v305
    %v354 = vpack.c.b16 %v308, %v307
    %v355 = vpack.c.b16 %v310, %v309
    %v356 = vpack.c.b16 %v312, %v311
    %v357 = vpack.c.b16 %v314, %v313
    %v358 = vpack.c.b16 %v316, %v315
    %v359 = vpack.c.b16 %v318, %v317
    %v360 = vpack.c.b16 %v320, %v319
    %v361 = vpack.c.b16 %v322, %v321
    %v362 = vpack.c.b16 %v324, %v323
    %v363 = vpack.c.b16 %v326, %v325
    %v364 = vpack.c.b16 %v328, %v327
    %v365 = vpack.c.b16 %v330, %v329
    %v366 = vpack.c.b16 %v332, %v331
    %v367 = vpack.c.b16 %v334, %v333
    %v368 = vpack.c.b16 %v336, %v335
    %v369 = vpack.c.b16 %v338, %v337
    %v370 = vpack.c.b16 %v340, %v339
    %v371 = vpack.c.b16 %v342, %v341
    %v372 = vpack.c.b16 %v344, %v343
    %v373 = vpack.c.b16 %v346, %v345
    %v374 = vpack.c.b16 %v348, %v347
    %v375 = vpack.c.b16 %v350, %v349
    %v384 = vunpack.c.l.b16 %v243
    %v385 = vunpack.c.l.b16 %v244
    %v386 = vunpack.c.l.b16 %v245
    %v387 = vunpack.c.l.b16 %v246
    %v388 = vunpack.c.l.b16 %v247
    %v389 = vunpack.c.l.b16 %v248
    %v390 = vunpack.c.l.b16 %v249
    %v391 = vunpack.c.l.b16 %v250
    %v392 = vpack.c.b16 %v385, %v384
    %v393 = vpack.c.b16 %v387, %v386
    %v394 = vpack.c.b16 %v389, %v388
    %v395 = vpack.c.b16 %v391, %v390
    %vm400 = vcmask 523264
    %v402 = vsel %vm400, %v351, 0
    %v405 = vsel %vm400, %v352, 0
    %v408 = vsel %vm400, %v353, 0
    %v411 = vsel %vm400, %v354, 0
    %v414 = vsel %vm400, %v355, 0
    %v417 = vsel %vm400, %v356, 0
    %v420 = vsel %vm400, %v357, 0
    %v423 = vsel %vm400, %v358, 0
    %v426 = vsel %vm400, %v359, 0
    %v429 = vsel %vm400, %v360, 0
    %v432 = vsel %vm400, %v361, 0
    %v435 = vsel %vm400, %v362, 0
    %v438 = vsel %vm400, %v363, 0
    %v441 = vsel %vm400, %v364, 0
    %v444 = vsel %vm400, %v365, 0
    %v447 = vsel %vm400, %v366, 0
    %v450 = vsel %vm400, %v367, 0
    %v453 = vsel %vm400, %v368, 0
    %v456 = vsel %vm400, %v369, 0
    %v459 = vsel %vm400, %v370, 0
    %v462 = vsel %vm400, %v371, 0
    %v465 = vsel %vm400, %v372, 0
    %v468 = vsel %vm400, %v373, 0
    %v471 = vsel %vm400, %v374, 0
    %v474 = vsel %vm400, %v375, 0
    %476 = vmatprep.subr.bf16.mxu0 0
    %477 = vmatpush1.bf16.msra.mxu0 0
    %478 = vmatprep.subr.bf16.mxu0 0
    %479 = vmatpush1.bf16.msra.mxu0 0
    %480 = vmatprep.subr.bf16.mxu0 0
    %481 = vmatpush1.bf16.msra.mxu0 0
    %482 = vmatprep.subr.bf16.mxu0 0
    %483 = vmatpush1.bf16.msra.mxu0 0
    %484 = vmatprep.subr.bf16.mxu0 0
    %485 = vmatpush1.bf16.msra.mxu0 %v395
    %486 = vmatprep.subr.bf16.mxu0 0
    %487 = vmatpush1.bf16.msra.mxu0 %v394
    %488 = vmatprep.subr.bf16.mxu0 0
    %489 = vmatpush1.bf16.msra.mxu0 %v393
    %490 = vmatprep.subr.bf16.mxu0 0
    %491 = vmatpush1.bf16.msra.mxu0 %v392
    %492 = vmatprep.subr.bf16.mxu0 0
    %493 = vmatpush2.bf16.msra.mxu0 0
    %494 = vmatprep.subr.bf16.mxu0 0
    %495 = vmatpush2.bf16.msra.mxu0 0
    %496 = vmatprep.subr.bf16.mxu0 0
    %497 = vmatpush2.bf16.msra.mxu0 0
    %498 = vmatprep.subr.bf16.mxu0 0
    %499 = vmatpush2.bf16.msra.mxu0 0
    %500 = vmatprep.subr.bf16.mxu0 0
    %501 = vmatpush2.bf16.msra.mxu0 0
    %502 = vmatprep.subr.bf16.mxu0 0
    %503 = vmatpush2.bf16.msra.mxu0 0
    %504 = vmatprep.subr.bf16.mxu0 0
    %505 = vmatpush2.bf16.msra.mxu0 0
    %506 = vmatprep.subr.bf16.mxu0 0
    %507 = vmatpush2.bf16.msra.mxu0 0
    %508 = vmatprep.mubr.bf16.mxu0 0
    %509 = vmatmul.mubr.bf16.gmra.mxu0 %v402
    %v510 = vpop.f32.mrf.mxu0
    %v511 = vadd.f32 0.0, %v510
    %v512 = vpop.f32.mrf.mxu0
    %v513 = vpop.f32.mrf.mxu0
    %v514 = vadd.f32 0.0, %v513
    %v515 = vpop.f32.mrf.mxu0
    %516 = vmatprep.mubr.bf16.mxu0 0
    %517 = vmatmul.mubr.bf16.gmra.mxu0 %v405
    %v518 = vpop.f32.mrf.mxu0
    %v519 = vadd.f32 0.0, %v518
    %v520 = vpop.f32.mrf.mxu0
    %v521 = vpop.f32.mrf.mxu0
    %v522 = vadd.f32 0.0, %v521
    %v523 = vpop.f32.mrf.mxu0
    %524 = vmatprep.mubr.bf16.mxu0 0
    %525 = vmatmul.mubr.bf16.gmra.mxu0 %v408
    %v526 = vpop.f32.mrf.mxu0
    %v527 = vadd.f32 0.0, %v526
    %v528 = vpop.f32.mrf.mxu0
    %v529 = vpop.f32.mrf.mxu0
    %v530 = vadd.f32 0.0, %v529
    %v531 = vpop.f32.mrf.mxu0
    %532 = vmatprep.mubr.bf16.mxu0 0
    %533 = vmatmul.mubr.bf16.gmra.mxu0 %v411
    %v534 = vpop.f32.mrf.mxu0
    %v535 = vadd.f32 0.0, %v534
    %v536 = vpop.f32.mrf.mxu0
    %v537 = vpop.f32.mrf.mxu0
    %v538 = vadd.f32 0.0, %v537
    %v539 = vpop.f32.mrf.mxu0
    %540 = vmatprep.mubr.bf16.mxu0 0
    %541 = vmatmul.mubr.bf16.gmra.mxu0 %v414
    %v542 = vpop.f32.mrf.mxu0
    %v543 = vadd.f32 0.0, %v542
    %v544 = vpop.f32.mrf.mxu0
    %v545 = vpop.f32.mrf.mxu0
    %v546 = vadd.f32 0.0, %v545
    %v547 = vpop.f32.mrf.mxu0
    %548 = vmatprep.mubr.bf16.mxu0 0
    %549 = vmatmul.mubr.bf16.gmra.mxu0 %v417
    %v550 = vpop.f32.mrf.mxu0
    %v551 = vadd.f32 0.0, %v550
    %v552 = vpop.f32.mrf.mxu0
    %v553 = vpop.f32.mrf.mxu0
    %v554 = vadd.f32 0.0, %v553
    %v555 = vpop.f32.mrf.mxu0
    %556 = vmatprep.mubr.bf16.mxu0 0
    %557 = vmatmul.mubr.bf16.gmra.mxu0 %v420
    %v558 = vpop.f32.mrf.mxu0
    %v559 = vadd.f32 0.0, %v558
    %v560 = vpop.f32.mrf.mxu0
    %v561 = vpop.f32.mrf.mxu0
    %v562 = vadd.f32 0.0, %v561
    %v563 = vpop.f32.mrf.mxu0
    %564 = vmatprep.mubr.bf16.mxu0 0
    %565 = vmatmul.mubr.bf16.gmra.mxu0 %v423
    %v566 = vpop.f32.mrf.mxu0
    %v567 = vadd.f32 0.0, %v566
    %v568 = vpop.f32.mrf.mxu0
    %v569 = vpop.f32.mrf.mxu0
    %v570 = vadd.f32 0.0, %v569
    %v571 = vpop.f32.mrf.mxu0
    %572 = vmatprep.mubr.bf16.mxu0 0
    %573 = vmatmul.mubr.bf16.gmra.mxu0 %v426
    %v574 = vpop.f32.mrf.mxu0
    %v575 = vadd.f32 0.0, %v574
    %v576 = vpop.f32.mrf.mxu0
    %v577 = vpop.f32.mrf.mxu0
    %v578 = vadd.f32 0.0, %v577
    %v579 = vpop.f32.mrf.mxu0
    %580 = vmatprep.mubr.bf16.mxu0 0
    %581 = vmatmul.mubr.bf16.gmra.mxu0 %v429
    %v582 = vpop.f32.mrf.mxu0
    %v583 = vadd.f32 0.0, %v582
    %v584 = vpop.f32.mrf.mxu0
    %v585 = vpop.f32.mrf.mxu0
    %v586 = vadd.f32 0.0, %v585
    %v587 = vpop.f32.mrf.mxu0
    %588 = vmatprep.mubr.bf16.mxu0 0
    %589 = vmatmul.mubr.bf16.gmra.mxu0 %v432
    %v590 = vpop.f32.mrf.mxu0
    %v591 = vadd.f32 0.0, %v590
    %v592 = vpop.f32.mrf.mxu0
    %v593 = vpop.f32.mrf.mxu0
    %v594 = vadd.f32 0.0, %v593
    %v595 = vpop.f32.mrf.mxu0
    %596 = vmatprep.mubr.bf16.mxu0 0
    %597 = vmatmul.mubr.bf16.gmra.mxu0 %v435
    %v598 = vpop.f32.mrf.mxu0
    %v599 = vadd.f32 0.0, %v598
    %v600 = vpop.f32.mrf.mxu0
    %v601 = vpop.f32.mrf.mxu0
    %v602 = vadd.f32 0.0, %v601
    %v603 = vpop.f32.mrf.mxu0
    %604 = vmatprep.mubr.bf16.mxu0 0
    %605 = vmatmul.mubr.bf16.gmra.mxu0 %v438
    %v606 = vpop.f32.mrf.mxu0
    %v607 = vadd.f32 0.0, %v606
    %v608 = vpop.f32.mrf.mxu0
    %v609 = vpop.f32.mrf.mxu0
    %v610 = vadd.f32 0.0, %v609
    %v611 = vpop.f32.mrf.mxu0
    %612 = vmatprep.mubr.bf16.mxu0 0
    %613 = vmatmul.mubr.bf16.gmra.mxu0 %v441
    %v614 = vpop.f32.mrf.mxu0
    %v615 = vadd.f32 0.0, %v614
    %v616 = vpop.f32.mrf.mxu0
    %v617 = vpop.f32.mrf.mxu0
    %v618 = vadd.f32 0.0, %v617
    %v619 = vpop.f32.mrf.mxu0
    %620 = vmatprep.mubr.bf16.mxu0 0
    %621 = vmatmul.mubr.bf16.gmra.mxu0 %v444
    %v622 = vpop.f32.mrf.mxu0
    %v623 = vadd.f32 0.0, %v622
    %v624 = vpop.f32.mrf.mxu0
    %v625 = vpop.f32.mrf.mxu0
    %v626 = vadd.f32 0.0, %v625
    %v627 = vpop.f32.mrf.mxu0
    %628 = vmatprep.mubr.bf16.mxu0 0
    %629 = vmatmul.mubr.bf16.gmra.mxu0 %v447
    %v630 = vpop.f32.mrf.mxu0
    %v631 = vadd.f32 0.0, %v630
    %v632 = vpop.f32.mrf.mxu0
    %v633 = vpop.f32.mrf.mxu0
    %v634 = vadd.f32 0.0, %v633
    %v635 = vpop.f32.mrf.mxu0
    %636 = vmatprep.mubr.bf16.mxu0 0
    %637 = vmatmul.mubr.bf16.gmra.mxu0 %v450
    %v638 = vpop.f32.mrf.mxu0
    %v639 = vadd.f32 0.0, %v638
    %v640 = vpop.f32.mrf.mxu0
    %v641 = vpop.f32.mrf.mxu0
    %v642 = vadd.f32 0.0, %v641
    %v643 = vpop.f32.mrf.mxu0
    %644 = vmatprep.mubr.bf16.mxu0 0
    %645 = vmatmul.mubr.bf16.gmra.mxu0 %v453
    %v646 = vpop.f32.mrf.mxu0
    %v647 = vadd.f32 0.0, %v646
    %v648 = vpop.f32.mrf.mxu0
    %v649 = vpop.f32.mrf.mxu0
    %v650 = vadd.f32 0.0, %v649
    %v651 = vpop.f32.mrf.mxu0
    %652 = vmatprep.mubr.bf16.mxu0 0
    %653 = vmatmul.mubr.bf16.gmra.mxu0 %v456
    %v654 = vpop.f32.mrf.mxu0
    %v655 = vadd.f32 0.0, %v654
    %v656 = vpop.f32.mrf.mxu0
    %v657 = vpop.f32.mrf.mxu0
    %v658 = vadd.f32 0.0, %v657
    %v659 = vpop.f32.mrf.mxu0
    %660 = vmatprep.mubr.bf16.mxu0 0
    %661 = vmatmul.mubr.bf16.gmra.mxu0 %v459
    %v662 = vpop.f32.mrf.mxu0
    %v663 = vadd.f32 0.0, %v662
    %v664 = vpop.f32.mrf.mxu0
    %v665 = vpop.f32.mrf.mxu0
    %v666 = vadd.f32 0.0, %v665
    %v667 = vpop.f32.mrf.mxu0
    %668 = vmatprep.mubr.bf16.mxu0 0
    %669 = vmatmul.mubr.bf16.gmra.mxu0 %v462
    %v670 = vpop.f32.mrf.mxu0
    %v671 = vadd.f32 0.0, %v670
    %v672 = vpop.f32.mrf.mxu0
    %v673 = vpop.f32.mrf.mxu0
    %v674 = vadd.f32 0.0, %v673
    %v675 = vpop.f32.mrf.mxu0
    %676 = vmatprep.mubr.bf16.mxu0 0
    %677 = vmatmul.mubr.bf16.gmra.mxu0 %v465
    %v678 = vpop.f32.mrf.mxu0
    %v679 = vadd.f32 0.0, %v678
    %v680 = vpop.f32.mrf.mxu0
    %v681 = vpop.f32.mrf.mxu0
    %v682 = vadd.f32 0.0, %v681
    %v683 = vpop.f32.mrf.mxu0
    %684 = vmatprep.mubr.bf16.mxu0 0
    %685 = vmatmul.mubr.bf16.gmra.mxu0 %v468
    %v686 = vpop.f32.mrf.mxu0
    %v687 = vadd.f32 0.0, %v686
    %v688 = vpop.f32.mrf.mxu0
    %v689 = vpop.f32.mrf.mxu0
    %v690 = vadd.f32 0.0, %v689
    %v691 = vpop.f32.mrf.mxu0
    %692 = vmatprep.mubr.bf16.mxu0 0
    %693 = vmatmul.mubr.bf16.gmra.mxu0 %v471
    %v694 = vpop.f32.mrf.mxu0
    %v695 = vadd.f32 0.0, %v694
    %v696 = vpop.f32.mrf.mxu0
    %v697 = vpop.f32.mrf.mxu0
    %v698 = vadd.f32 0.0, %v697
    %v699 = vpop.f32.mrf.mxu0
    %700 = vmatprep.mubr.bf16.mxu0 0
    %701 = vmatmul.mubr.bf16.gmra.mxu0 %v474
    %v702 = vpop.f32.mrf.mxu0
    %v703 = vadd.f32 0.0, %v702
    %v704 = vpop.f32.mrf.mxu0
    %v705 = vpop.f32.mrf.mxu0
    %v706 = vadd.f32 0.0, %v705
    %v707 = vpop.f32.mrf.mxu0
    %708 = vdwg.mxu0
    %v710 = vlaneseq
    %v711 = vshrl.u32 %v710, 7
    %v712 = vsub.s32 0, %v711
    %v713 = vrot.slane %v242, %v712
    %v715 = vadd.f32 %v511, %v713
    %v716 = vadd.f32 %v514, %v713
    %v717 = vmax.f32 %v715, 0.0
    %v718 = vmax.f32 %v716, 0.0
    %v719 = vadd.f32 %v519, %v713
    %v720 = vadd.f32 %v522, %v713
    %v721 = vmax.f32 %v719, 0.0
    %v722 = vmax.f32 %v720, 0.0
    %v723 = vadd.f32 %v717, %v721
    %v724 = vadd.f32 %v718, %v722
    %v725 = vadd.f32 %v527, %v713
    %v726 = vadd.f32 %v530, %v713
    %v727 = vmax.f32 %v725, 0.0
    %v728 = vmax.f32 %v726, 0.0
    %v729 = vadd.f32 %v723, %v727
    %v730 = vadd.f32 %v724, %v728
    %v731 = vadd.f32 %v535, %v713
    %v732 = vadd.f32 %v538, %v713
    %v733 = vmax.f32 %v731, 0.0
    %v734 = vmax.f32 %v732, 0.0
    %v735 = vadd.f32 %v729, %v733
    %v736 = vadd.f32 %v730, %v734
    %v737 = vadd.f32 %v543, %v713
    %v738 = vadd.f32 %v546, %v713
    %v739 = vmax.f32 %v737, 0.0
    %v740 = vmax.f32 %v738, 0.0
    %v741 = vadd.f32 %v735, %v739
    %v742 = vadd.f32 %v736, %v740
    %v743 = vadd.f32 %v551, %v713
    %v744 = vadd.f32 %v554, %v713
    %v745 = vmax.f32 %v743, 0.0
    %v746 = vmax.f32 %v744, 0.0
    %v747 = vadd.f32 %v741, %v745
    %v748 = vadd.f32 %v742, %v746
    %v749 = vadd.f32 %v559, %v713
    %v750 = vadd.f32 %v562, %v713
    %v751 = vmax.f32 %v749, 0.0
    %v752 = vmax.f32 %v750, 0.0
    %v753 = vadd.f32 %v747, %v751
    %v754 = vadd.f32 %v748, %v752
    %v755 = vadd.f32 %v567, %v713
    %v756 = vadd.f32 %v570, %v713
    %v757 = vmax.f32 %v755, 0.0
    %v758 = vmax.f32 %v756, 0.0
    %v759 = vadd.f32 %v753, %v757
    %v760 = vadd.f32 %v754, %v758
    %v761 = vadd.f32 %v575, %v713
    %v762 = vadd.f32 %v578, %v713
    %v763 = vmax.f32 %v761, 0.0
    %v764 = vmax.f32 %v762, 0.0
    %v765 = vadd.f32 %v759, %v763
    %v766 = vadd.f32 %v760, %v764
    %v767 = vadd.f32 %v583, %v713
    %v768 = vadd.f32 %v586, %v713
    %v769 = vmax.f32 %v767, 0.0
    %v770 = vmax.f32 %v768, 0.0
    %v771 = vadd.f32 %v765, %v769
    %v772 = vadd.f32 %v766, %v770
    %v773 = vadd.f32 %v591, %v713
    %v774 = vadd.f32 %v594, %v713
    %v775 = vmax.f32 %v773, 0.0
    %v776 = vmax.f32 %v774, 0.0
    %v777 = vadd.f32 %v771, %v775
    %v778 = vadd.f32 %v772, %v776
    %v779 = vadd.f32 %v599, %v713
    %v780 = vadd.f32 %v602, %v713
    %v781 = vmax.f32 %v779, 0.0
    %v782 = vmax.f32 %v780, 0.0
    %v783 = vadd.f32 %v777, %v781
    %v784 = vadd.f32 %v778, %v782
    %v785 = vadd.f32 %v607, %v713
    %v786 = vadd.f32 %v610, %v713
    %v787 = vmax.f32 %v785, 0.0
    %v788 = vmax.f32 %v786, 0.0
    %v789 = vadd.f32 %v783, %v787
    %v790 = vadd.f32 %v784, %v788
    %v791 = vadd.f32 %v615, %v713
    %v792 = vadd.f32 %v618, %v713
    %v793 = vmax.f32 %v791, 0.0
    %v794 = vmax.f32 %v792, 0.0
    %v795 = vadd.f32 %v789, %v793
    %v796 = vadd.f32 %v790, %v794
    %v797 = vadd.f32 %v623, %v713
    %v798 = vadd.f32 %v626, %v713
    %v799 = vmax.f32 %v797, 0.0
    %v800 = vmax.f32 %v798, 0.0
    %v801 = vadd.f32 %v795, %v799
    %v802 = vadd.f32 %v796, %v800
    %v803 = vadd.f32 %v631, %v713
    %v804 = vadd.f32 %v634, %v713
    %v805 = vmax.f32 %v803, 0.0
    %v806 = vmax.f32 %v804, 0.0
    %v807 = vadd.f32 %v801, %v805
    %v808 = vadd.f32 %v802, %v806
    %v809 = vadd.f32 %v639, %v713
    %v810 = vadd.f32 %v642, %v713
    %v811 = vmax.f32 %v809, 0.0
    %v812 = vmax.f32 %v810, 0.0
    %v813 = vadd.f32 %v807, %v811
    %v814 = vadd.f32 %v808, %v812
    %v815 = vadd.f32 %v647, %v713
    %v816 = vadd.f32 %v650, %v713
    %v817 = vmax.f32 %v815, 0.0
    %v818 = vmax.f32 %v816, 0.0
    %v819 = vadd.f32 %v813, %v817
    %v820 = vadd.f32 %v814, %v818
    %v821 = vadd.f32 %v655, %v713
    %v822 = vadd.f32 %v658, %v713
    %v823 = vmax.f32 %v821, 0.0
    %v824 = vmax.f32 %v822, 0.0
    %v825 = vadd.f32 %v819, %v823
    %v826 = vadd.f32 %v820, %v824
    %v827 = vadd.f32 %v663, %v713
    %v828 = vadd.f32 %v666, %v713
    %v829 = vmax.f32 %v827, 0.0
    %v830 = vmax.f32 %v828, 0.0
    %v831 = vadd.f32 %v825, %v829
    %v832 = vadd.f32 %v826, %v830
    %v833 = vadd.f32 %v671, %v713
    %v834 = vadd.f32 %v674, %v713
    %v835 = vmax.f32 %v833, 0.0
    %v836 = vmax.f32 %v834, 0.0
    %v837 = vadd.f32 %v831, %v835
    %v838 = vadd.f32 %v832, %v836
    %v839 = vadd.f32 %v679, %v713
    %v840 = vadd.f32 %v682, %v713
    %v841 = vmax.f32 %v839, 0.0
    %v842 = vmax.f32 %v840, 0.0
    %v843 = vadd.f32 %v837, %v841
    %v844 = vadd.f32 %v838, %v842
    %v845 = vadd.f32 %v687, %v713
    %v846 = vadd.f32 %v690, %v713
    %v847 = vmax.f32 %v845, 0.0
    %v848 = vmax.f32 %v846, 0.0
    %v849 = vadd.f32 %v843, %v847
    %v850 = vadd.f32 %v844, %v848
    %v851 = vadd.f32 %v695, %v713
    %v852 = vadd.f32 %v698, %v713
    %v853 = vmax.f32 %v851, 0.0
    %v854 = vmax.f32 %v852, 0.0
    %v855 = vadd.f32 %v849, %v853
    %v856 = vadd.f32 %v850, %v854
    %v857 = vadd.f32 %v703, %v713
    %v858 = vadd.f32 %v706, %v713
    %v859 = vmax.f32 %v857, 0.0
    %v860 = vmax.f32 %v858, 0.0
    %v861 = vadd.f32 %v855, %v859
    %v862 = vadd.f32 %v856, %v860
    %v863 = vmul.f32 %v861, 0.04
    %v864 = vmul.f32 %v862, 0.04
    %v865 = vld [vmem:[%s5] sm:$0x1]
    %v866 = vld [vmem:[#allocation8] sm:$0xf]
    %v867 = vld [vmem:[#allocation8 + $0x4] sm:$0xf]
    %v868 = vld [vmem:[#allocation8 + $0x8] sm:$0xf]
    %v869 = vld [vmem:[#allocation8 + $0xc] sm:$0xf]
    %v870 = vld [vmem:[#allocation8 + $0x10] sm:$0xf]
    %v871 = vld [vmem:[#allocation8 + $0x14] sm:$0xf]
    %v872 = vld [vmem:[#allocation8 + $0x18] sm:$0xf]
    %v873 = vld [vmem:[#allocation8 + $0x1c] sm:$0xf]
    %v924 = vunpack.c.l.b16 %v192
    %v925 = vunpack.c.l.b16 %v193
    %v926 = vunpack.c.l.b16 %v194
    %v927 = vunpack.c.l.b16 %v195
    %v928 = vunpack.c.l.b16 %v196
    %v929 = vunpack.c.l.b16 %v197
    %v930 = vunpack.c.l.b16 %v198
    %v931 = vunpack.c.l.b16 %v199
    %v932 = vunpack.c.l.b16 %v200
    %v933 = vunpack.c.l.b16 %v201
    %v934 = vunpack.c.l.b16 %v202
    %v935 = vunpack.c.l.b16 %v203
    %v936 = vunpack.c.l.b16 %v204
    %v937 = vunpack.c.l.b16 %v205
    %v938 = vunpack.c.l.b16 %v206
    %v939 = vunpack.c.l.b16 %v207
    %v940 = vunpack.c.l.b16 %v208
    %v941 = vunpack.c.l.b16 %v209
    %v942 = vunpack.c.l.b16 %v210
    %v943 = vunpack.c.l.b16 %v211
    %v944 = vunpack.c.l.b16 %v212
    %v945 = vunpack.c.l.b16 %v213
    %v946 = vunpack.c.l.b16 %v214
    %v947 = vunpack.c.l.b16 %v215
    %v948 = vunpack.c.l.b16 %v216
    %v949 = vunpack.c.l.b16 %v217
    %v950 = vunpack.c.l.b16 %v218
    %v951 = vunpack.c.l.b16 %v219
    %v952 = vunpack.c.l.b16 %v220
    %v953 = vunpack.c.l.b16 %v221
    %v954 = vunpack.c.l.b16 %v222
    %v955 = vunpack.c.l.b16 %v223
    %v956 = vunpack.c.l.b16 %v224
    %v957 = vunpack.c.l.b16 %v225
    %v958 = vunpack.c.l.b16 %v226
    %v959 = vunpack.c.l.b16 %v227
    %v960 = vunpack.c.l.b16 %v228
    %v961 = vunpack.c.l.b16 %v229
    %v962 = vunpack.c.l.b16 %v230
    %v963 = vunpack.c.l.b16 %v231
    %v964 = vunpack.c.l.b16 %v232
    %v965 = vunpack.c.l.b16 %v233
    %v966 = vunpack.c.l.b16 %v234
    %v967 = vunpack.c.l.b16 %v235
    %v968 = vunpack.c.l.b16 %v236
    %v969 = vunpack.c.l.b16 %v237
    %v970 = vunpack.c.l.b16 %v238
    %v971 = vunpack.c.l.b16 %v239
    %v972 = vunpack.c.l.b16 %v240
    %v973 = vunpack.c.l.b16 %v241
    %v974 = vpack.c.b16 %v925, %v924
    %v975 = vpack.c.b16 %v927, %v926
    %v976 = vpack.c.b16 %v929, %v928
    %v977 = vpack.c.b16 %v931, %v930
    %v978 = vpack.c.b16 %v933, %v932
    %v979 = vpack.c.b16 %v935, %v934
    %v980 = vpack.c.b16 %v937, %v936
    %v981 = vpack.c.b16 %v939, %v938
    %v982 = vpack.c.b16 %v941, %v940
    %v983 = vpack.c.b16 %v943, %v942
    %v984 = vpack.c.b16 %v945, %v944
    %v985 = vpack.c.b16 %v947, %v946
    %v986 = vpack.c.b16 %v949, %v948
    %v987 = vpack.c.b16 %v951, %v950
    %v988 = vpack.c.b16 %v953, %v952
    %v989 = vpack.c.b16 %v955, %v954
    %v990 = vpack.c.b16 %v957, %v956
    %v991 = vpack.c.b16 %v959, %v958
    %v992 = vpack.c.b16 %v961, %v960
    %v993 = vpack.c.b16 %v963, %v962
    %v994 = vpack.c.b16 %v965, %v964
    %v995 = vpack.c.b16 %v967, %v966
    %v996 = vpack.c.b16 %v969, %v968
    %v997 = vpack.c.b16 %v971, %v970
    %v998 = vpack.c.b16 %v973, %v972
    %v1007 = vunpack.c.l.b16 %v866
    %v1008 = vunpack.c.l.b16 %v867
    %v1009 = vunpack.c.l.b16 %v868
    %v1010 = vunpack.c.l.b16 %v869
    %v1011 = vunpack.c.l.b16 %v870
    %v1012 = vunpack.c.l.b16 %v871
    %v1013 = vunpack.c.l.b16 %v872
    %v1014 = vunpack.c.l.b16 %v873
    %v1015 = vpack.c.b16 %v1008, %v1007
    %v1016 = vpack.c.b16 %v1010, %v1009
    %v1017 = vpack.c.b16 %v1012, %v1011
    %v1018 = vpack.c.b16 %v1014, %v1013
    %v1024 = vsel %vm400, %v974, 0
    %v1027 = vsel %vm400, %v975, 0
    %v1030 = vsel %vm400, %v976, 0
    %v1033 = vsel %vm400, %v977, 0
    %v1036 = vsel %vm400, %v978, 0
    %v1039 = vsel %vm400, %v979, 0
    %v1042 = vsel %vm400, %v980, 0
    %v1045 = vsel %vm400, %v981, 0
    %v1048 = vsel %vm400, %v982, 0
    %v1051 = vsel %vm400, %v983, 0
    %v1054 = vsel %vm400, %v984, 0
    %v1057 = vsel %vm400, %v985, 0
    %v1060 = vsel %vm400, %v986, 0
    %v1063 = vsel %vm400, %v987, 0
    %v1066 = vsel %vm400, %v988, 0
    %v1069 = vsel %vm400, %v989, 0
    %v1072 = vsel %vm400, %v990, 0
    %v1075 = vsel %vm400, %v991, 0
    %v1078 = vsel %vm400, %v992, 0
    %v1081 = vsel %vm400, %v993, 0
    %v1084 = vsel %vm400, %v994, 0
    %v1087 = vsel %vm400, %v995, 0
    %v1090 = vsel %vm400, %v996, 0
    %v1093 = vsel %vm400, %v997, 0
    %v1096 = vsel %vm400, %v998, 0
    %1098 = vmatprep.subr.bf16.mxu0 0
    %1099 = vmatpush1.bf16.msra.mxu0 0
    %1100 = vmatprep.subr.bf16.mxu0 0
    %1101 = vmatpush1.bf16.msra.mxu0 0
    %1102 = vmatprep.subr.bf16.mxu0 0
    %1103 = vmatpush1.bf16.msra.mxu0 0
    %1104 = vmatprep.subr.bf16.mxu0 0
    %1105 = vmatpush1.bf16.msra.mxu0 0
    %1106 = vmatprep.subr.bf16.mxu0 0
    %1107 = vmatpush1.bf16.msra.mxu0 %v1018
    %1108 = vmatprep.subr.bf16.mxu0 0
    %1109 = vmatpush1.bf16.msra.mxu0 %v1017
    %1110 = vmatprep.subr.bf16.mxu0 0
    %1111 = vmatpush1.bf16.msra.mxu0 %v1016
    %1112 = vmatprep.subr.bf16.mxu0 0
    %1113 = vmatpush1.bf16.msra.mxu0 %v1015
    %1114 = vmatprep.subr.bf16.mxu0 0
    %1115 = vmatpush2.bf16.msra.mxu0 0
    %1116 = vmatprep.subr.bf16.mxu0 0
    %1117 = vmatpush2.bf16.msra.mxu0 0
    %1118 = vmatprep.subr.bf16.mxu0 0
    %1119 = vmatpush2.bf16.msra.mxu0 0
    %1120 = vmatprep.subr.bf16.mxu0 0
    %1121 = vmatpush2.bf16.msra.mxu0 0
    %1122 = vmatprep.subr.bf16.mxu0 0
    %1123 = vmatpush2.bf16.msra.mxu0 0
    %1124 = vmatprep.subr.bf16.mxu0 0
    %1125 = vmatpush2.bf16.msra.mxu0 0
    %1126 = vmatprep.subr.bf16.mxu0 0
    %1127 = vmatpush2.bf16.msra.mxu0 0
    %1128 = vmatprep.subr.bf16.mxu0 0
    %1129 = vmatpush2.bf16.msra.mxu0 0
    %1130 = vmatprep.mubr.bf16.mxu0 0
    %1131 = vmatmul.mubr.bf16.gmra.mxu0 %v1024
    %v1132 = vpop.f32.mrf.mxu0
    %v1133 = vadd.f32 0.0, %v1132
    %v1134 = vpop.f32.mrf.mxu0
    %v1135 = vpop.f32.mrf.mxu0
    %v1136 = vadd.f32 0.0, %v1135
    %v1137 = vpop.f32.mrf.mxu0
    %1138 = vmatprep.mubr.bf16.mxu0 0
    %1139 = vmatmul.mubr.bf16.gmra.mxu0 %v1027
    %v1140 = vpop.f32.mrf.mxu0
    %v1141 = vadd.f32 0.0, %v1140
    %v1142 = vpop.f32.mrf.mxu0
    %v1143 = vpop.f32.mrf.mxu0
    %v1144 = vadd.f32 0.0, %v1143
    %v1145 = vpop.f32.mrf.mxu0
    %1146 = vmatprep.mubr.bf16.mxu0 0
    %1147 = vmatmul.mubr.bf16.gmra.mxu0 %v1030
    %v1148 = vpop.f32.mrf.mxu0
    %v1149 = vadd.f32 0.0, %v1148
    %v1150 = vpop.f32.mrf.mxu0
    %v1151 = vpop.f32.mrf.mxu0
    %v1152 = vadd.f32 0.0, %v1151
    %v1153 = vpop.f32.mrf.mxu0
    %1154 = vmatprep.mubr.bf16.mxu0 0
    %1155 = vmatmul.mubr.bf16.gmra.mxu0 %v1033
    %v1156 = vpop.f32.mrf.mxu0
    %v1157 = vadd.f32 0.0, %v1156
    %v1158 = vpop.f32.mrf.mxu0
    %v1159 = vpop.f32.mrf.mxu0
    %v1160 = vadd.f32 0.0, %v1159
    %v1161 = vpop.f32.mrf.mxu0
    %1162 = vmatprep.mubr.bf16.mxu0 0
    %1163 = vmatmul.mubr.bf16.gmra.mxu0 %v1036
    %v1164 = vpop.f32.mrf.mxu0
    %v1165 = vadd.f32 0.0, %v1164
    %v1166 = vpop.f32.mrf.mxu0
    %v1167 = vpop.f32.mrf.mxu0
    %v1168 = vadd.f32 0.0, %v1167
    %v1169 = vpop.f32.mrf.mxu0
    %1170 = vmatprep.mubr.bf16.mxu0 0
    %1171 = vmatmul.mubr.bf16.gmra.mxu0 %v1039
    %v1172 = vpop.f32.mrf.mxu0
    %v1173 = vadd.f32 0.0, %v1172
    %v1174 = vpop.f32.mrf.mxu0
    %v1175 = vpop.f32.mrf.mxu0
    %v1176 = vadd.f32 0.0, %v1175
    %v1177 = vpop.f32.mrf.mxu0
    %1178 = vmatprep.mubr.bf16.mxu0 0
    %1179 = vmatmul.mubr.bf16.gmra.mxu0 %v1042
    %v1180 = vpop.f32.mrf.mxu0
    %v1181 = vadd.f32 0.0, %v1180
    %v1182 = vpop.f32.mrf.mxu0
    %v1183 = vpop.f32.mrf.mxu0
    %v1184 = vadd.f32 0.0, %v1183
    %v1185 = vpop.f32.mrf.mxu0
    %1186 = vmatprep.mubr.bf16.mxu0 0
    %1187 = vmatmul.mubr.bf16.gmra.mxu0 %v1045
    %v1188 = vpop.f32.mrf.mxu0
    %v1189 = vadd.f32 0.0, %v1188
    %v1190 = vpop.f32.mrf.mxu0
    %v1191 = vpop.f32.mrf.mxu0
    %v1192 = vadd.f32 0.0, %v1191
    %v1193 = vpop.f32.mrf.mxu0
    %1194 = vmatprep.mubr.bf16.mxu0 0
    %1195 = vmatmul.mubr.bf16.gmra.mxu0 %v1048
    %v1196 = vpop.f32.mrf.mxu0
    %v1197 = vadd.f32 0.0, %v1196
    %v1198 = vpop.f32.mrf.mxu0
    %v1199 = vpop.f32.mrf.mxu0
    %v1200 = vadd.f32 0.0, %v1199
    %v1201 = vpop.f32.mrf.mxu0
    %1202 = vmatprep.mubr.bf16.mxu0 0
    %1203 = vmatmul.mubr.bf16.gmra.mxu0 %v1051
    %v1204 = vpop.f32.mrf.mxu0
    %v1205 = vadd.f32 0.0, %v1204
    %v1206 = vpop.f32.mrf.mxu0
    %v1207 = vpop.f32.mrf.mxu0
    %v1208 = vadd.f32 0.0, %v1207
    %v1209 = vpop.f32.mrf.mxu0
    %1210 = vmatprep.mubr.bf16.mxu0 0
    %1211 = vmatmul.mubr.bf16.gmra.mxu0 %v1054
    %v1212 = vpop.f32.mrf.mxu0
    %v1213 = vadd.f32 0.0, %v1212
    %v1214 = vpop.f32.mrf.mxu0
    %v1215 = vpop.f32.mrf.mxu0
    %v1216 = vadd.f32 0.0, %v1215
    %v1217 = vpop.f32.mrf.mxu0
    %1218 = vmatprep.mubr.bf16.mxu0 0
    %1219 = vmatmul.mubr.bf16.gmra.mxu0 %v1057
    %v1220 = vpop.f32.mrf.mxu0
    %v1221 = vadd.f32 0.0, %v1220
    %v1222 = vpop.f32.mrf.mxu0
    %v1223 = vpop.f32.mrf.mxu0
    %v1224 = vadd.f32 0.0, %v1223
    %v1225 = vpop.f32.mrf.mxu0
    %1226 = vmatprep.mubr.bf16.mxu0 0
    %1227 = vmatmul.mubr.bf16.gmra.mxu0 %v1060
    %v1228 = vpop.f32.mrf.mxu0
    %v1229 = vadd.f32 0.0, %v1228
    %v1230 = vpop.f32.mrf.mxu0
    %v1231 = vpop.f32.mrf.mxu0
    %v1232 = vadd.f32 0.0, %v1231
    %v1233 = vpop.f32.mrf.mxu0
    %1234 = vmatprep.mubr.bf16.mxu0 0
    %1235 = vmatmul.mubr.bf16.gmra.mxu0 %v1063
    %v1236 = vpop.f32.mrf.mxu0
    %v1237 = vadd.f32 0.0, %v1236
    %v1238 = vpop.f32.mrf.mxu0
    %v1239 = vpop.f32.mrf.mxu0
    %v1240 = vadd.f32 0.0, %v1239
    %v1241 = vpop.f32.mrf.mxu0
    %1242 = vmatprep.mubr.bf16.mxu0 0
    %1243 = vmatmul.mubr.bf16.gmra.mxu0 %v1066
    %v1244 = vpop.f32.mrf.mxu0
    %v1245 = vadd.f32 0.0, %v1244
    %v1246 = vpop.f32.mrf.mxu0
    %v1247 = vpop.f32.mrf.mxu0
    %v1248 = vadd.f32 0.0, %v1247
    %v1249 = vpop.f32.mrf.mxu0
    %1250 = vmatprep.mubr.bf16.mxu0 0
    %1251 = vmatmul.mubr.bf16.gmra.mxu0 %v1069
    %v1252 = vpop.f32.mrf.mxu0
    %v1253 = vadd.f32 0.0, %v1252
    %v1254 = vpop.f32.mrf.mxu0
    %v1255 = vpop.f32.mrf.mxu0
    %v1256 = vadd.f32 0.0, %v1255
    %v1257 = vpop.f32.mrf.mxu0
    %1258 = vmatprep.mubr.bf16.mxu0 0
    %1259 = vmatmul.mubr.bf16.gmra.mxu0 %v1072
    %v1260 = vpop.f32.mrf.mxu0
    %v1261 = vadd.f32 0.0, %v1260
    %v1262 = vpop.f32.mrf.mxu0
    %v1263 = vpop.f32.mrf.mxu0
    %v1264 = vadd.f32 0.0, %v1263
    %v1265 = vpop.f32.mrf.mxu0
    %1266 = vmatprep.mubr.bf16.mxu0 0
    %1267 = vmatmul.mubr.bf16.gmra.mxu0 %v1075
    %v1268 = vpop.f32.mrf.mxu0
    %v1269 = vadd.f32 0.0, %v1268
    %v1270 = vpop.f32.mrf.mxu0
    %v1271 = vpop.f32.mrf.mxu0
    %v1272 = vadd.f32 0.0, %v1271
    %v1273 = vpop.f32.mrf.mxu0
    %1274 = vmatprep.mubr.bf16.mxu0 0
    %1275 = vmatmul.mubr.bf16.gmra.mxu0 %v1078
    %v1276 = vpop.f32.mrf.mxu0
    %v1277 = vadd.f32 0.0, %v1276
    %v1278 = vpop.f32.mrf.mxu0
    %v1279 = vpop.f32.mrf.mxu0
    %v1280 = vadd.f32 0.0, %v1279
    %v1281 = vpop.f32.mrf.mxu0
    %1282 = vmatprep.mubr.bf16.mxu0 0
    %1283 = vmatmul.mubr.bf16.gmra.mxu0 %v1081
    %v1284 = vpop.f32.mrf.mxu0
    %v1285 = vadd.f32 0.0, %v1284
    %v1286 = vpop.f32.mrf.mxu0
    %v1287 = vpop.f32.mrf.mxu0
    %v1288 = vadd.f32 0.0, %v1287
    %v1289 = vpop.f32.mrf.mxu0
    %1290 = vmatprep.mubr.bf16.mxu0 0
    %1291 = vmatmul.mubr.bf16.gmra.mxu0 %v1084
    %v1292 = vpop.f32.mrf.mxu0
    %v1293 = vadd.f32 0.0, %v1292
    %v1294 = vpop.f32.mrf.mxu0
    %v1295 = vpop.f32.mrf.mxu0
    %v1296 = vadd.f32 0.0, %v1295
    %v1297 = vpop.f32.mrf.mxu0
    %1298 = vmatprep.mubr.bf16.mxu0 0
    %1299 = vmatmul.mubr.bf16.gmra.mxu0 %v1087
    %v1300 = vpop.f32.mrf.mxu0
    %v1301 = vadd.f32 0.0, %v1300
    %v1302 = vpop.f32.mrf.mxu0
    %v1303 = vpop.f32.mrf.mxu0
    %v1304 = vadd.f32 0.0, %v1303
    %v1305 = vpop.f32.mrf.mxu0
    %1306 = vmatprep.mubr.bf16.mxu0 0
    %1307 = vmatmul.mubr.bf16.gmra.mxu0 %v1090
    %v1308 = vpop.f32.mrf.mxu0
    %v1309 = vadd.f32 0.0, %v1308
    %v1310 = vpop.f32.mrf.mxu0
    %v1311 = vpop.f32.mrf.mxu0
    %v1312 = vadd.f32 0.0, %v1311
    %v1313 = vpop.f32.mrf.mxu0
    %1314 = vmatprep.mubr.bf16.mxu0 0
    %1315 = vmatmul.mubr.bf16.gmra.mxu0 %v1093
    %v1316 = vpop.f32.mrf.mxu0
    %v1317 = vadd.f32 0.0, %v1316
    %v1318 = vpop.f32.mrf.mxu0
    %v1319 = vpop.f32.mrf.mxu0
    %v1320 = vadd.f32 0.0, %v1319
    %v1321 = vpop.f32.mrf.mxu0
    %1322 = vmatprep.mubr.bf16.mxu0 0
    %1323 = vmatmul.mubr.bf16.gmra.mxu0 %v1096
    %v1324 = vpop.f32.mrf.mxu0
    %v1325 = vadd.f32 0.0, %v1324
    %v1326 = vpop.f32.mrf.mxu0
    %v1327 = vpop.f32.mrf.mxu0
    %v1328 = vadd.f32 0.0, %v1327
    %v1329 = vpop.f32.mrf.mxu0
    %1330 = vdwg.mxu0
    %v1332 = vlaneseq
    %v1333 = vshrl.u32 %v1332, 7
    %v1334 = vsub.s32 0, %v1333
    %v1335 = vrot.slane %v865, %v1334
    %v1337 = vadd.f32 %v1133, %v1335
    %v1338 = vadd.f32 %v1136, %v1335
    %v1339 = vmax.f32 %v1337, 0.0
    %v1340 = vmax.f32 %v1338, 0.0
    %v1341 = vadd.f32 %v1141, %v1335
    %v1342 = vadd.f32 %v1144, %v1335
    %v1343 = vmax.f32 %v1341, 0.0
    %v1344 = vmax.f32 %v1342, 0.0
    %v1345 = vadd.f32 %v1339, %v1343
    %v1346 = vadd.f32 %v1340, %v1344
    %v1347 = vadd.f32 %v1149, %v1335
    %v1348 = vadd.f32 %v1152, %v1335
    %v1349 = vmax.f32 %v1347, 0.0
    %v1350 = vmax.f32 %v1348, 0.0
    %v1351 = vadd.f32 %v1345, %v1349
    %v1352 = vadd.f32 %v1346, %v1350
    %v1353 = vadd.f32 %v1157, %v1335
    %v1354 = vadd.f32 %v1160, %v1335
    %v1355 = vmax.f32 %v1353, 0.0
    %v1356 = vmax.f32 %v1354, 0.0
    %v1357 = vadd.f32 %v1351, %v1355
    %v1358 = vadd.f32 %v1352, %v1356
    %v1359 = vadd.f32 %v1165, %v1335
    %v1360 = vadd.f32 %v1168, %v1335
    %v1361 = vmax.f32 %v1359, 0.0
    %v1362 = vmax.f32 %v1360, 0.0
    %v1363 = vadd.f32 %v1357, %v1361
    %v1364 = vadd.f32 %v1358, %v1362
    %v1365 = vadd.f32 %v1173, %v1335
    %v1366 = vadd.f32 %v1176, %v1335
    %v1367 = vmax.f32 %v1365, 0.0
    %v1368 = vmax.f32 %v1366, 0.0
    %v1369 = vadd.f32 %v1363, %v1367
    %v1370 = vadd.f32 %v1364, %v1368
    %v1371 = vadd.f32 %v1181, %v1335
    %v1372 = vadd.f32 %v1184, %v1335
    %v1373 = vmax.f32 %v1371, 0.0
    %v1374 = vmax.f32 %v1372, 0.0
    %v1375 = vadd.f32 %v1369, %v1373
    %v1376 = vadd.f32 %v1370, %v1374
    %v1377 = vadd.f32 %v1189, %v1335
    %v1378 = vadd.f32 %v1192, %v1335
    %v1379 = vmax.f32 %v1377, 0.0
    %v1380 = vmax.f32 %v1378, 0.0
    %v1381 = vadd.f32 %v1375, %v1379
    %v1382 = vadd.f32 %v1376, %v1380
    %v1383 = vadd.f32 %v1197, %v1335
    %v1384 = vadd.f32 %v1200, %v1335
    %v1385 = vmax.f32 %v1383, 0.0
    %v1386 = vmax.f32 %v1384, 0.0
    %v1387 = vadd.f32 %v1381, %v1385
    %v1388 = vadd.f32 %v1382, %v1386
    %v1389 = vadd.f32 %v1205, %v1335
    %v1390 = vadd.f32 %v1208, %v1335
    %v1391 = vmax.f32 %v1389, 0.0
    %v1392 = vmax.f32 %v1390, 0.0
    %v1393 = vadd.f32 %v1387, %v1391
    %v1394 = vadd.f32 %v1388, %v1392
    %v1395 = vadd.f32 %v1213, %v1335
    %v1396 = vadd.f32 %v1216, %v1335
    %v1397 = vmax.f32 %v1395, 0.0
    %v1398 = vmax.f32 %v1396, 0.0
    %v1399 = vadd.f32 %v1393, %v1397
    %v1400 = vadd.f32 %v1394, %v1398
    %v1401 = vadd.f32 %v1221, %v1335
    %v1402 = vadd.f32 %v1224, %v1335
    %v1403 = vmax.f32 %v1401, 0.0
    %v1404 = vmax.f32 %v1402, 0.0
    %v1405 = vadd.f32 %v1399, %v1403
    %v1406 = vadd.f32 %v1400, %v1404
    %v1407 = vadd.f32 %v1229, %v1335
    %v1408 = vadd.f32 %v1232, %v1335
    %v1409 = vmax.f32 %v1407, 0.0
    %v1410 = vmax.f32 %v1408, 0.0
    %v1411 = vadd.f32 %v1405, %v1409
    %v1412 = vadd.f32 %v1406, %v1410
    %v1413 = vadd.f32 %v1237, %v1335
    %v1414 = vadd.f32 %v1240, %v1335
    %v1415 = vmax.f32 %v1413, 0.0
    %v1416 = vmax.f32 %v1414, 0.0
    %v1417 = vadd.f32 %v1411, %v1415
    %v1418 = vadd.f32 %v1412, %v1416
    %v1419 = vadd.f32 %v1245, %v1335
    %v1420 = vadd.f32 %v1248, %v1335
    %v1421 = vmax.f32 %v1419, 0.0
    %v1422 = vmax.f32 %v1420, 0.0
    %v1423 = vadd.f32 %v1417, %v1421
    %v1424 = vadd.f32 %v1418, %v1422
    %v1425 = vadd.f32 %v1253, %v1335
    %v1426 = vadd.f32 %v1256, %v1335
    %v1427 = vmax.f32 %v1425, 0.0
    %v1428 = vmax.f32 %v1426, 0.0
    %v1429 = vadd.f32 %v1423, %v1427
    %v1430 = vadd.f32 %v1424, %v1428
    %v1431 = vadd.f32 %v1261, %v1335
    %v1432 = vadd.f32 %v1264, %v1335
    %v1433 = vmax.f32 %v1431, 0.0
    %v1434 = vmax.f32 %v1432, 0.0
    %v1435 = vadd.f32 %v1429, %v1433
    %v1436 = vadd.f32 %v1430, %v1434
    %v1437 = vadd.f32 %v1269, %v1335
    %v1438 = vadd.f32 %v1272, %v1335
    %v1439 = vmax.f32 %v1437, 0.0
    %v1440 = vmax.f32 %v1438, 0.0
    %v1441 = vadd.f32 %v1435, %v1439
    %v1442 = vadd.f32 %v1436, %v1440
    %v1443 = vadd.f32 %v1277, %v1335
    %v1444 = vadd.f32 %v1280, %v1335
    %v1445 = vmax.f32 %v1443, 0.0
    %v1446 = vmax.f32 %v1444, 0.0
    %v1447 = vadd.f32 %v1441, %v1445
    %v1448 = vadd.f32 %v1442, %v1446
    %v1449 = vadd.f32 %v1285, %v1335
    %v1450 = vadd.f32 %v1288, %v1335
    %v1451 = vmax.f32 %v1449, 0.0
    %v1452 = vmax.f32 %v1450, 0.0
    %v1453 = vadd.f32 %v1447, %v1451
    %v1454 = vadd.f32 %v1448, %v1452
    %v1455 = vadd.f32 %v1293, %v1335
    %v1456 = vadd.f32 %v1296, %v1335
    %v1457 = vmax.f32 %v1455, 0.0
    %v1458 = vmax.f32 %v1456, 0.0
    %v1459 = vadd.f32 %v1453, %v1457
    %v1460 = vadd.f32 %v1454, %v1458
    %v1461 = vadd.f32 %v1301, %v1335
    %v1462 = vadd.f32 %v1304, %v1335
    %v1463 = vmax.f32 %v1461, 0.0
    %v1464 = vmax.f32 %v1462, 0.0
    %v1465 = vadd.f32 %v1459, %v1463
    %v1466 = vadd.f32 %v1460, %v1464
    %v1467 = vadd.f32 %v1309, %v1335
    %v1468 = vadd.f32 %v1312, %v1335
    %v1469 = vmax.f32 %v1467, 0.0
    %v1470 = vmax.f32 %v1468, 0.0
    %v1471 = vadd.f32 %v1465, %v1469
    %v1472 = vadd.f32 %v1466, %v1470
    %v1473 = vadd.f32 %v1317, %v1335
    %v1474 = vadd.f32 %v1320, %v1335
    %v1475 = vmax.f32 %v1473, 0.0
    %v1476 = vmax.f32 %v1474, 0.0
    %v1477 = vadd.f32 %v1471, %v1475
    %v1478 = vadd.f32 %v1472, %v1476
    %v1479 = vadd.f32 %v1325, %v1335
    %v1480 = vadd.f32 %v1328, %v1335
    %v1481 = vmax.f32 %v1479, 0.0
    %v1482 = vmax.f32 %v1480, 0.0
    %v1483 = vadd.f32 %v1477, %v1481
    %v1484 = vadd.f32 %v1478, %v1482
    %v1485 = vmul.f32 %v1483, 0.04
    %v1486 = vmul.f32 %v1484, 0.04
    %v1487 = vunpack.c.l.bf16 %v142
    %v1488 = vunpack.c.l.bf16 %v143
    %v1489 = vunpack.c.l.bf16 %v144
    %v1490 = vunpack.c.l.bf16 %v145
    %v1491 = vadd.f32 %v1487, %v1489
    %v1492 = vadd.f32 %v1488, %v1490
    %v1493 = vunpack.c.l.bf16 %v146
    %v1494 = vunpack.c.l.bf16 %v147
    %v1495 = vadd.f32 %v1491, %v1493
    %v1496 = vadd.f32 %v1492, %v1494
    %v1497 = vunpack.c.l.bf16 %v148
    %v1498 = vunpack.c.l.bf16 %v149
    %v1499 = vadd.f32 %v1495, %v1497
    %v1500 = vadd.f32 %v1496, %v1498
    %v1501 = vunpack.c.l.bf16 %v150
    %v1502 = vunpack.c.l.bf16 %v151
    %v1503 = vadd.f32 %v1499, %v1501
    %v1504 = vadd.f32 %v1500, %v1502
    %v1505 = vunpack.c.l.bf16 %v152
    %v1506 = vunpack.c.l.bf16 %v153
    %v1507 = vadd.f32 %v1503, %v1505
    %v1508 = vadd.f32 %v1504, %v1506
    %v1509 = vunpack.c.l.bf16 %v154
    %v1510 = vunpack.c.l.bf16 %v155
    %v1511 = vadd.f32 %v1507, %v1509
    %v1512 = vadd.f32 %v1508, %v1510
    %v1513 = vunpack.c.l.bf16 %v156
    %v1514 = vunpack.c.l.bf16 %v157
    %v1515 = vadd.f32 %v1511, %v1513
    %v1516 = vadd.f32 %v1512, %v1514
    %v1517 = vunpack.c.l.bf16 %v158
    %v1518 = vunpack.c.l.bf16 %v159
    %v1519 = vadd.f32 %v1515, %v1517
    %v1520 = vadd.f32 %v1516, %v1518
    %v1521 = vunpack.c.l.bf16 %v160
    %v1522 = vunpack.c.l.bf16 %v161
    %v1523 = vadd.f32 %v1519, %v1521
    %v1524 = vadd.f32 %v1520, %v1522
    %v1525 = vunpack.c.l.bf16 %v162
    %v1526 = vunpack.c.l.bf16 %v163
    %v1527 = vadd.f32 %v1523, %v1525
    %v1528 = vadd.f32 %v1524, %v1526
    %v1529 = vunpack.c.l.bf16 %v164
    %v1530 = vunpack.c.l.bf16 %v165
    %v1531 = vadd.f32 %v1527, %v1529
    %v1532 = vadd.f32 %v1528, %v1530
    %v1533 = vunpack.c.l.bf16 %v166
    %v1534 = vunpack.c.l.bf16 %v167
    %v1535 = vadd.f32 %v1531, %v1533
    %v1536 = vadd.f32 %v1532, %v1534
    %v1537 = vunpack.c.l.bf16 %v168
    %v1538 = vunpack.c.l.bf16 %v169
    %v1539 = vadd.f32 %v1535, %v1537
    %v1540 = vadd.f32 %v1536, %v1538
    %v1541 = vunpack.c.l.bf16 %v170
    %v1542 = vunpack.c.l.bf16 %v171
    %v1543 = vadd.f32 %v1539, %v1541
    %v1544 = vadd.f32 %v1540, %v1542
    %v1545 = vunpack.c.l.bf16 %v172
    %v1546 = vunpack.c.l.bf16 %v173
    %v1547 = vadd.f32 %v1543, %v1545
    %v1548 = vadd.f32 %v1544, %v1546
    %v1549 = vunpack.c.l.bf16 %v174
    %v1550 = vunpack.c.l.bf16 %v175
    %v1551 = vadd.f32 %v1547, %v1549
    %v1552 = vadd.f32 %v1548, %v1550
    %v1553 = vunpack.c.l.bf16 %v176
    %v1554 = vunpack.c.l.bf16 %v177
    %v1555 = vadd.f32 %v1551, %v1553
    %v1556 = vadd.f32 %v1552, %v1554
    %v1557 = vunpack.c.l.bf16 %v178
    %v1558 = vunpack.c.l.bf16 %v179
    %v1559 = vadd.f32 %v1555, %v1557
    %v1560 = vadd.f32 %v1556, %v1558
    %v1561 = vunpack.c.l.bf16 %v180
    %v1562 = vunpack.c.l.bf16 %v181
    %v1563 = vadd.f32 %v1559, %v1561
    %v1564 = vadd.f32 %v1560, %v1562
    %v1565 = vunpack.c.l.bf16 %v182
    %v1566 = vunpack.c.l.bf16 %v183
    %v1567 = vadd.f32 %v1563, %v1565
    %v1568 = vadd.f32 %v1564, %v1566
    %v1569 = vunpack.c.l.bf16 %v184
    %v1570 = vunpack.c.l.bf16 %v185
    %v1571 = vadd.f32 %v1567, %v1569
    %v1572 = vadd.f32 %v1568, %v1570
    %v1573 = vunpack.c.l.bf16 %v186
    %v1574 = vunpack.c.l.bf16 %v187
    %v1575 = vadd.f32 %v1571, %v1573
    %v1576 = vadd.f32 %v1572, %v1574
    %v1577 = vunpack.c.l.bf16 %v188
    %v1578 = vunpack.c.l.bf16 %v189
    %v1579 = vadd.f32 %v1575, %v1577
    %v1580 = vadd.f32 %v1576, %v1578
    %v1581 = vunpack.c.l.bf16 %v190
    %v1582 = vunpack.c.l.bf16 %v191
    %v1583 = vadd.f32 %v1579, %v1581
    %v1584 = vadd.f32 %v1580, %v1582
    %v1585 = vmul.f32 %v1583, 0.04
    %v1586 = vmul.f32 %v1584, 0.04
    %v1587 = vpack.c.bf16 %v1586, %v1585
    %v1589 = vsel %vm400, %v1587, 0
    %1591 = vmatprep.subr.bf16.mxu0 0
    %1592 = vmatpush1.bf16.msra.mxu0 0
    %1593 = vmatprep.subr.bf16.mxu0 0
    %1594 = vmatpush1.bf16.msra.mxu0 0
    %1595 = vmatprep.subr.bf16.mxu0 0
    %1596 = vmatpush1.bf16.msra.mxu0 0
    %1597 = vmatprep.subr.bf16.mxu0 0
    %1598 = vmatpush1.bf16.msra.mxu0 0
    %1599 = vmatprep.subr.bf16.mxu0 0
    %1600 = vmatpush1.bf16.msra.mxu0 %v1018
    %1601 = vmatprep.subr.bf16.mxu0 0
    %1602 = vmatpush1.bf16.msra.mxu0 %v1017
    %1603 = vmatprep.subr.bf16.mxu0 0
    %1604 = vmatpush1.bf16.msra.mxu0 %v1016
    %1605 = vmatprep.subr.bf16.mxu0 0
    %1606 = vmatpush1.bf16.msra.mxu0 %v1015
    %1607 = vmatprep.subr.bf16.mxu0 0
    %1608 = vmatpush2.bf16.msra.mxu0 0
    %1609 = vmatprep.subr.bf16.mxu0 0
    %1610 = vmatpush2.bf16.msra.mxu0 0
    %1611 = vmatprep.subr.bf16.mxu0 0
    %1612 = vmatpush2.bf16.msra.mxu0 0
    %1613 = vmatprep.subr.bf16.mxu0 0
    %1614 = vmatpush2.bf16.msra.mxu0 0
    %1615 = vmatprep.subr.bf16.mxu0 0
    %1616 = vmatpush2.bf16.msra.mxu0 0
    %1617 = vmatprep.subr.bf16.mxu0 0
    %1618 = vmatpush2.bf16.msra.mxu0 0
    %1619 = vmatprep.subr.bf16.mxu0 0
    %1620 = vmatpush2.bf16.msra.mxu0 0
    %1621 = vmatprep.subr.bf16.mxu0 0
    %1622 = vmatpush2.bf16.msra.mxu0 0
    %1623 = vmatprep.mubr.bf16.mxu0 0
    %1624 = vmatmul.mubr.bf16.gmra.mxu0 %v1589
    %v1625 = vpop.f32.mrf.mxu0
    %v1626 = vadd.f32 %v1335, %v1625
    %v1627 = vpop.f32.mrf.mxu0
    %v1628 = vpop.f32.mrf.mxu0
    %v1629 = vadd.f32 %v1335, %v1628
    %v1630 = vpop.f32.mrf.mxu0
    %1631 = vdwg.mxu0
    %v1632 = vmax.f32 %v1626, 0.0
    %v1633 = vmax.f32 %v1629, 0.0
    %v1634 = vld [vmem:[%s7] sm:$0x1]
    %v1635 = vpack.c.bf16 %v1633, %v1632
    %v1636 = vld [vmem:[#allocation10] sm:$0xf]
    %v1637 = vld [vmem:[#allocation10 + $0x4] sm:$0xf]
    %v1638 = vld [vmem:[#allocation10 + $0x8] sm:$0xf]
    %v1639 = vld [vmem:[#allocation10 + $0xc] sm:$0xf]
    %v1640 = vld [vmem:[#allocation10 + $0x10] sm:$0xf]
    %v1641 = vld [vmem:[#allocation10 + $0x14] sm:$0xf]
    %v1642 = vld [vmem:[#allocation10 + $0x18] sm:$0xf]
    %v1643 = vld [vmem:[#allocation10 + $0x1c] sm:$0xf]
    %v1644 = vld [vmem:[#allocation10 + $0x20] sm:$0xf]
    %v1645 = vld [vmem:[#allocation10 + $0x24] sm:$0xf]
    %v1646 = vld [vmem:[#allocation10 + $0x28] sm:$0xf]
    %v1647 = vld [vmem:[#allocation10 + $0x2c] sm:$0xf]
    %v1648 = vld [vmem:[#allocation10 + $0x30] sm:$0xf]
    %v1649 = vld [vmem:[#allocation10 + $0x34] sm:$0xf]
    %v1650 = vld [vmem:[#allocation10 + $0x38] sm:$0xf]
    %v1651 = vld [vmem:[#allocation10 + $0x3c] sm:$0xf]
    %v1668 = vunpack.c.l.b16 %v1636
    %v1669 = vunpack.c.l.b16 %v1637
    %v1670 = vunpack.c.l.b16 %v1638
    %v1671 = vunpack.c.l.b16 %v1639
    %v1672 = vunpack.c.l.b16 %v1640
    %v1673 = vunpack.c.l.b16 %v1641
    %v1674 = vunpack.c.l.b16 %v1642
    %v1675 = vunpack.c.l.b16 %v1643
    %v1676 = vunpack.c.l.b16 %v1644
    %v1677 = vunpack.c.l.b16 %v1645
    %v1678 = vunpack.c.l.b16 %v1646
    %v1679 = vunpack.c.l.b16 %v1647
    %v1680 = vunpack.c.l.b16 %v1648
    %v1681 = vunpack.c.l.b16 %v1649
    %v1682 = vunpack.c.l.b16 %v1650
    %v1683 = vunpack.c.l.b16 %v1651
    %v1684 = vpack.c.b16 %v1669, %v1668
    %v1685 = vpack.c.b16 %v1671, %v1670
    %v1686 = vpack.c.b16 %v1673, %v1672
    %v1687 = vpack.c.b16 %v1675, %v1674
    %v1688 = vpack.c.b16 %v1677, %v1676
    %v1689 = vpack.c.b16 %v1679, %v1678
    %v1690 = vpack.c.b16 %v1681, %v1680
    %v1691 = vpack.c.b16 %v1683, %v1682
    %1700 = vmatprep.subr.bf16.mxu0 0
    %1701 = vmatpush1.bf16.msra.mxu0 %v1691
    %1702 = vmatprep.subr.bf16.mxu0 0
    %1703 = vmatpush1.bf16.msra.mxu0 %v1690
    %1704 = vmatprep.subr.bf16.mxu0 0
    %1705 = vmatpush1.bf16.msra.mxu0 %v1689
    %1706 = vmatprep.subr.bf16.mxu0 0
    %1707 = vmatpush1.bf16.msra.mxu0 %v1688
    %1708 = vmatprep.subr.bf16.mxu0 0
    %1709 = vmatpush1.bf16.msra.mxu0 %v1687
    %1710 = vmatprep.subr.bf16.mxu0 0
    %1711 = vmatpush1.bf16.msra.mxu0 %v1686
    %1712 = vmatprep.subr.bf16.mxu0 0
    %1713 = vmatpush1.bf16.msra.mxu0 %v1685
    %1714 = vmatprep.subr.bf16.mxu0 0
    %1715 = vmatpush1.bf16.msra.mxu0 %v1684
    %1716 = vmatprep.subr.bf16.mxu0 0
    %1717 = vmatpush2.bf16.msra.mxu0 0
    %1718 = vmatprep.subr.bf16.mxu0 0
    %1719 = vmatpush2.bf16.msra.mxu0 0
    %1720 = vmatprep.subr.bf16.mxu0 0
    %1721 = vmatpush2.bf16.msra.mxu0 0
    %1722 = vmatprep.subr.bf16.mxu0 0
    %1723 = vmatpush2.bf16.msra.mxu0 0
    %1724 = vmatprep.subr.bf16.mxu0 0
    %1725 = vmatpush2.bf16.msra.mxu0 0
    %1726 = vmatprep.subr.bf16.mxu0 0
    %1727 = vmatpush2.bf16.msra.mxu0 0
    %1728 = vmatprep.subr.bf16.mxu0 0
    %1729 = vmatpush2.bf16.msra.mxu0 0
    %1730 = vmatprep.subr.bf16.mxu0 0
    %1731 = vmatpush2.bf16.msra.mxu0 0
    %1732 = vmatprep.mubr.bf16.mxu0 0
    %1733 = vmatmul.mubr.bf16.gmra.mxu0 %v1635
    %v1734 = vpop.f32.mrf.mxu0
    %v1735 = vadd.f32 0.0, %v1734
    %v1736 = vpop.f32.mrf.mxu0
    %v1737 = vpop.f32.mrf.mxu0
    %v1738 = vadd.f32 0.0, %v1737
    %v1739 = vpop.f32.mrf.mxu0
    %1740 = vdwg.mxu0
    %v1742 = vlaneseq
    %v1743 = vshrl.u32 %v1742, 7
    %v1744 = vsub.s32 0, %v1743
    %v1745 = vrot.slane %v1634, %v1744
    %v1747 = vadd.f32 %v1745, %v1735
    %v1748 = vadd.f32 %v1745, %v1738
    %v1749 = vpack.c.bf16 %v864, %v863
    %v1750 = vld [vmem:[#allocation11] sm:$0xf]
    %v1751 = vld [vmem:[#allocation11 + $0x4] sm:$0xf]
    %v1752 = vld [vmem:[#allocation11 + $0x8] sm:$0xf]
    %v1753 = vld [vmem:[#allocation11 + $0xc] sm:$0xf]
    %v1754 = vld [vmem:[#allocation11 + $0x10] sm:$0xf]
    %v1755 = vld [vmem:[#allocation11 + $0x14] sm:$0xf]
    %v1756 = vld [vmem:[#allocation11 + $0x18] sm:$0xf]
    %v1757 = vld [vmem:[#allocation11 + $0x1c] sm:$0xf]
    %v1758 = vld [vmem:[#allocation11 + $0x20] sm:$0xf]
    %v1759 = vld [vmem:[#allocation11 + $0x24] sm:$0xf]
    %v1760 = vld [vmem:[#allocation11 + $0x28] sm:$0xf]
    %v1761 = vld [vmem:[#allocation11 + $0x2c] sm:$0xf]
    %v1762 = vld [vmem:[#allocation11 + $0x30] sm:$0xf]
    %v1763 = vld [vmem:[#allocation11 + $0x34] sm:$0xf]
    %v1764 = vld [vmem:[#allocation11 + $0x38] sm:$0xf]
    %v1765 = vld [vmem:[#allocation11 + $0x3c] sm:$0xf]
    %v1766 = vpack.c.bf16 %v1486, %v1485
    %v1767 = vld [vmem:[#allocation13] sm:$0xf]
    %v1768 = vld [vmem:[#allocation13 + $0x4] sm:$0xf]
    %v1769 = vld [vmem:[#allocation13 + $0x8] sm:$0xf]
    %v1770 = vld [vmem:[#allocation13 + $0xc] sm:$0xf]
    %v1771 = vld [vmem:[#allocation13 + $0x10] sm:$0xf]
    %v1772 = vld [vmem:[#allocation13 + $0x14] sm:$0xf]
    %v1773 = vld [vmem:[#allocation13 + $0x18] sm:$0xf]
    %v1774 = vld [vmem:[#allocation13 + $0x1c] sm:$0xf]
    %v1775 = vld [vmem:[#allocation13 + $0x20] sm:$0xf]
    %v1776 = vld [vmem:[#allocation13 + $0x24] sm:$0xf]
    %v1777 = vld [vmem:[#allocation13 + $0x28] sm:$0xf]
    %v1778 = vld [vmem:[#allocation13 + $0x2c] sm:$0xf]
    %v1779 = vld [vmem:[#allocation13 + $0x30] sm:$0xf]
    %v1780 = vld [vmem:[#allocation13 + $0x34] sm:$0xf]
    %v1781 = vld [vmem:[#allocation13 + $0x38] sm:$0xf]
    %v1782 = vld [vmem:[#allocation13 + $0x3c] sm:$0xf]
    %v1799 = vunpack.c.l.b16 %v1767
    %v1800 = vunpack.c.l.b16 %v1768
    %v1801 = vunpack.c.l.b16 %v1769
    %v1802 = vunpack.c.l.b16 %v1770
    %v1803 = vunpack.c.l.b16 %v1771
    %v1804 = vunpack.c.l.b16 %v1772
    %v1805 = vunpack.c.l.b16 %v1773
    %v1806 = vunpack.c.l.b16 %v1774
    %v1807 = vunpack.c.l.b16 %v1775
    %v1808 = vunpack.c.l.b16 %v1776
    %v1809 = vunpack.c.l.b16 %v1777
    %v1810 = vunpack.c.l.b16 %v1778
    %v1811 = vunpack.c.l.b16 %v1779
    %v1812 = vunpack.c.l.b16 %v1780
    %v1813 = vunpack.c.l.b16 %v1781
    %v1814 = vunpack.c.l.b16 %v1782
    %v1815 = vpack.c.b16 %v1800, %v1799
    %v1816 = vpack.c.b16 %v1802, %v1801
    %v1817 = vpack.c.b16 %v1804, %v1803
    %v1818 = vpack.c.b16 %v1806, %v1805
    %v1819 = vpack.c.b16 %v1808, %v1807
    %v1820 = vpack.c.b16 %v1810, %v1809
    %v1821 = vpack.c.b16 %v1812, %v1811
    %v1822 = vpack.c.b16 %v1814, %v1813
    %1831 = vmatprep.subr.bf16.mxu0 0
    %1832 = vmatpush1.bf16.msra.mxu0 %v1822
    %1833 = vmatprep.subr.bf16.mxu0 0
    %1834 = vmatpush1.bf16.msra.mxu0 %v1821
    %1835 = vmatprep.subr.bf16.mxu0 0
    %1836 = vmatpush1.bf16.msra.mxu0 %v1820
    %1837 = vmatprep.subr.bf16.mxu0 0
    %1838 = vmatpush1.bf16.msra.mxu0 %v1819
    %1839 = vmatprep.subr.bf16.mxu0 0
    %1840 = vmatpush1.bf16.msra.mxu0 %v1818
    %1841 = vmatprep.subr.bf16.mxu0 0
    %1842 = vmatpush1.bf16.msra.mxu0 %v1817
    %1843 = vmatprep.subr.bf16.mxu0 0
    %1844 = vmatpush1.bf16.msra.mxu0 %v1816
    %1845 = vmatprep.subr.bf16.mxu0 0
    %1846 = vmatpush1.bf16.msra.mxu0 %v1815
    %1847 = vmatprep.subr.bf16.mxu0 0
    %1848 = vmatpush2.bf16.msra.mxu0 0
    %1849 = vmatprep.subr.bf16.mxu0 0
    %1850 = vmatpush2.bf16.msra.mxu0 0
    %1851 = vmatprep.subr.bf16.mxu0 0
    %1852 = vmatpush2.bf16.msra.mxu0 0
    %1853 = vmatprep.subr.bf16.mxu0 0
    %1854 = vmatpush2.bf16.msra.mxu0 0
    %1855 = vmatprep.subr.bf16.mxu0 0
    %1856 = vmatpush2.bf16.msra.mxu0 0
    %1857 = vmatprep.subr.bf16.mxu0 0
    %1858 = vmatpush2.bf16.msra.mxu0 0
    %1859 = vmatprep.subr.bf16.mxu0 0
    %1860 = vmatpush2.bf16.msra.mxu0 0
    %1861 = vmatprep.subr.bf16.mxu0 0
    %1862 = vmatpush2.bf16.msra.mxu0 0
    %1863 = vmatprep.mubr.bf16.mxu0 0
    %1864 = vmatmul.mubr.bf16.gmra.mxu0 %v1766
    %v1865 = vpop.f32.mrf.mxu0
    %v1866 = vadd.f32 0.0, %v1865
    %v1867 = vpop.f32.mrf.mxu0
    %v1868 = vpop.f32.mrf.mxu0
    %v1869 = vadd.f32 0.0, %v1868
    %v1870 = vpop.f32.mrf.mxu0
    %1871 = vdwg.mxu0
    %v1888 = vunpack.c.l.b16 %v1750
    %v1889 = vunpack.c.l.b16 %v1751
    %v1890 = vunpack.c.l.b16 %v1752
    %v1891 = vunpack.c.l.b16 %v1753
    %v1892 = vunpack.c.l.b16 %v1754
    %v1893 = vunpack.c.l.b16 %v1755
    %v1894 = vunpack.c.l.b16 %v1756
    %v1895 = vunpack.c.l.b16 %v1757
    %v1896 = vunpack.c.l.b16 %v1758
    %v1897 = vunpack.c.l.b16 %v1759
    %v1898 = vunpack.c.l.b16 %v1760
    %v1899 = vunpack.c.l.b16 %v1761
    %v1900 = vunpack.c.l.b16 %v1762
    %v1901 = vunpack.c.l.b16 %v1763
    %v1902 = vunpack.c.l.b16 %v1764
    %v1903 = vunpack.c.l.b16 %v1765
    %v1904 = vpack.c.b16 %v1889, %v1888
    %v1905 = vpack.c.b16 %v1891, %v1890
    %v1906 = vpack.c.b16 %v1893, %v1892
    %v1907 = vpack.c.b16 %v1895, %v1894
    %v1908 = vpack.c.b16 %v1897, %v1896
    %v1909 = vpack.c.b16 %v1899, %v1898
    %v1910 = vpack.c.b16 %v1901, %v1900
    %v1911 = vpack.c.b16 %v1903, %v1902
    %1920 = vmatprep.subr.bf16.mxu0 0
    %1921 = vmatpush1.bf16.msra.mxu0 %v1911
    %1922 = vmatprep.subr.bf16.mxu0 0
    %1923 = vmatpush1.bf16.msra.mxu0 %v1910
    %1924 = vmatprep.subr.bf16.mxu0 0
    %1925 = vmatpush1.bf16.msra.mxu0 %v1909
    %1926 = vmatprep.subr.bf16.mxu0 0
    %1927 = vmatpush1.bf16.msra.mxu0 %v1908
    %1928 = vmatprep.subr.bf16.mxu0 0
    %1929 = vmatpush1.bf16.msra.mxu0 %v1907
    %1930 = vmatprep.subr.bf16.mxu0 0
    %1931 = vmatpush1.bf16.msra.mxu0 %v1906
    %1932 = vmatprep.subr.bf16.mxu0 0
    %1933 = vmatpush1.bf16.msra.mxu0 %v1905
    %1934 = vmatprep.subr.bf16.mxu0 0
    %1935 = vmatpush1.bf16.msra.mxu0 %v1904
    %1936 = vmatprep.subr.bf16.mxu0 0
    %1937 = vmatpush2.bf16.msra.mxu0 0
    %1938 = vmatprep.subr.bf16.mxu0 0
    %1939 = vmatpush2.bf16.msra.mxu0 0
    %1940 = vmatprep.subr.bf16.mxu0 0
    %1941 = vmatpush2.bf16.msra.mxu0 0
    %1942 = vmatprep.subr.bf16.mxu0 0
    %1943 = vmatpush2.bf16.msra.mxu0 0
    %1944 = vmatprep.subr.bf16.mxu0 0
    %1945 = vmatpush2.bf16.msra.mxu0 0
    %1946 = vmatprep.subr.bf16.mxu0 0
    %1947 = vmatpush2.bf16.msra.mxu0 0
    %1948 = vmatprep.subr.bf16.mxu0 0
    %1949 = vmatpush2.bf16.msra.mxu0 0
    %1950 = vmatprep.subr.bf16.mxu0 0
    %1951 = vmatpush2.bf16.msra.mxu0 0
    %1952 = vmatprep.mubr.bf16.mxu0 0
    %1953 = vmatmul.mubr.bf16.gmra.mxu0 %v1749
    %v1954 = vpop.f32.mrf.mxu0
    %v1955 = vadd.f32 %v1866, %v1954
    %v1956 = vpop.f32.mrf.mxu0
    %v1957 = vpop.f32.mrf.mxu0
    %v1958 = vadd.f32 %v1869, %v1957
    %v1959 = vpop.f32.mrf.mxu0
    %1960 = vdwg.mxu0
    %v1961 = vmul.f32 %v1747, %v1747
    %v1962 = vmul.f32 %v1748, %v1748
    %1963 = vadd.xlane.f32.xlu0 %v1961
    %v1964 = vpop.xlane.xlu0 %1963
    %1965 = vadd.xlane.f32.xlu0 %v1962
    %v1966 = vpop.xlane.xlu0 %1965
    %v1967 = vmul.f32 %v1955, %v1955
    %v1968 = vmul.f32 %v1958, %v1958
    %1969 = vadd.xlane.f32.xlu0 %v1967
    %v1970 = vpop.xlane.xlu0 %1969
    %1971 = vadd.xlane.f32.xlu0 %v1968
    %v1972 = vpop.xlane.xlu0 %1971
    %v1973 = vadd.f32 %v1964, %v1970
    %v1974 = vadd.f32 %v1966, %v1972
    %v1975 = vmax.f32 %v1973, 1e-24
    %v1976 = vmax.f32 %v1974, 1e-24
    %v1977 = vrsqrt.pop %v1975
    %v1978 = vrsqrt.pop %v1976
    %v1979 = vld [vmem:[%s10] sm:$0x1]
    %v1981 = vlaneseq
    %v1982 = vshrl.u32 %v1981, 7
    %v1983 = vsub.s32 0, %v1982
    %v1984 = vrot.slane %v1979, %v1983
    %v1986 = vmul.f32 %v1747, %v1984
    %v1987 = vmul.f32 %v1748, %v1984
    %1988 = vadd.xlane.f32.xlu0 %v1986
    %v1989 = vpop.xlane.xlu0 %1988
    %1990 = vadd.xlane.f32.xlu0 %v1987
    %v1991 = vpop.xlane.xlu0 %1990
    %v1992 = vld [vmem:[%s11] sm:$0x1]
    %v1994 = vlaneseq
    %v1995 = vshrl.u32 %v1994, 7
    %v1996 = vsub.s32 0, %v1995
    %v1997 = vrot.slane %v1992, %v1996
    %v1999 = vmul.f32 %v1955, %v1997
    %v2000 = vmul.f32 %v1958, %v1997
    %2001 = vadd.xlane.f32.xlu0 %v1999
    %v2002 = vpop.xlane.xlu0 %2001
    %2003 = vadd.xlane.f32.xlu0 %v2000
    %v2004 = vpop.xlane.xlu0 %2003
    %v2005 = vadd.f32 %v1989, %v2002
    %v2006 = vadd.f32 %v1991, %v2004
    %v2007 = vmul.f32 %v2005, %v1977
    %v2008 = vmul.f32 %v2006, %v1978
    %v2009 = vld [vmem:[#allocation2] sm:$0x1]
    %v2011 = vlaneseq
    %v2012 = vshrl.u32 %v2011, 7
    %v2013 = vsub.s32 0, %v2012
    %v2014 = vrot.slane %v2009, %v2013
    %v2016 = vadd.f32 %v2007, %v2014
    %v2017 = vadd.f32 %v2008, %v2014
    %vm2018 = vcmask 7168
    %2019 = vst.msk [vmem:[%s13] sm:$0xff] %vm2018, %v2016
    %2020 = vst.msk [vmem:[%s13 + $0x8] sm:$0xff] %vm2018, %v2017
    // Predicated region
    $region82: #{tpu_custom_call.1} parent=1 // pred_check
      _
    $region83: #{tpu_custom_call.1} parent=1 // pred_check_branch
      %2022 = sbr.rel (0) target = $region85
    $region84: #{tpu_custom_call.1} parent=1 // pred_region
      _
    $region85: #{tpu_custom_call.1} parent=1 // pred_fallthru
      _
    // Predicated region
    $region86: #{tpu_custom_call.1} parent=1 // pred_check
      _
    $region87: #{tpu_custom_call.1} parent=1 // pred_check_branch
      %2024 = sbr.rel (0) target = $region89
    $region88: #{tpu_custom_call.1} parent=1 // pred_region
      _
    $region89: #{tpu_custom_call.1} parent=1 // pred_fallthru
      _
    %2025 = vsyncpa [#allocation4], 1
    %2026 = vsyncpa [#allocation6], 1
    %2027 = vsyncpa [#allocation9], 1
    %2028 = vsyncpa [#allocation12], 1

</llo_original>
